<compile_context>
chip_gen: v6e
topology: v6e:2x2x1
jax: 0.10.0
libtpu: 0.0.40
codegen_flags: <defaults>
</compile_context>

<pallas_src>
import functools

import jax
import jax.numpy as jnp
import numpy as np
from jax.experimental import pallas as pl
from jax.experimental.pallas import tpu as pltpu


def _attn_kernel(x_ref, wqkv_ref, bqkv_ref, o_ref, *, heads, scale):
    """Per batch element: fused QKV projection + multi-head attention.

    x_ref    : (1, C, N)  bf16
    wqkv_ref : (3C, C)    bf16   rows = [wq; wk; wv]
    bqkv_ref : (3C, 1)    f32
    o_ref    : (1, C, N)  f32    row h*d + j holds head-h channel-j over pixels
                                 (per-head transposed attention output)
    """
    c = o_ref.shape[1]
    d = c // heads

    xb = x_ref[0]                                                    # (C, N)
    qkv = jnp.dot(wqkv_ref[...], xb,
                  preferred_element_type=jnp.float32) + bqkv_ref[...]  # (3C, N) f32
    q = qkv[0:c] * scale        # fold softmax scale into q once (C*N muls)
    k = qkv[c:2 * c]
    v = qkv[2 * c:3 * c]

    for hh in range(heads):     # heads is static -> fully unrolled
        qh = q[hh * d:(hh + 1) * d].astype(jnp.bfloat16)             # (d, N)
        kh = k[hh * d:(hh + 1) * d].astype(jnp.bfloat16)
        vh = v[hh * d:(hh + 1) * d].astype(jnp.bfloat16)

        # scores = qh^T @ kh, expressed by contracting dim 0 of both operands
        # (no explicit transpose materialized).
        s = jax.lax.dot_general(qh, kh, (((0,), (0,)), ((), ())),
                                preferred_element_type=jnp.float32)  # (N, N)
        s = s - jnp.max(s, axis=-1, keepdims=True)                   # XLU reduce
        p = jnp.exp(s)                                               # EUP
        p = p * pl.reciprocal(jnp.sum(p, axis=-1, keepdims=True), approx=True)
        # dropout(p=0.0) == identity

        # out_h^T = vh @ p^T : contract the key axis (dim 1 of both) -> (d, N),
        # lane-dense along N for the store.
        oht = jax.lax.dot_general(vh, p.astype(jnp.bfloat16),
                                  (((1,), (1,)), ((), ())),
                                  preferred_element_type=jnp.float32)
        o_ref[0, hh * d:(hh + 1) * d, :] = oht
    # TODO(synk): for production N (>=1024) tile the query axis with an
    # online-softmax accumulator so the (N, N) scores fit v7x's 64 MiB VMEM.


def _proj_bn_kernel(a_ref, x_ref, wp_ref, bp_ref, gamma_ref, beta_ref, o_ref,
                    *, eps, inv_count):
    """proj 1x1 conv + residual + train-mode BatchNorm2d on a (C, B*N) slab.

    a_ref, x_ref, o_ref : (C, B*N) f32 (batch merged onto the lane axis)
    wp_ref : (C, C)    bp/gamma/beta : (C, 1)
    """
    y = jnp.dot(wp_ref[...], a_ref[...], preferred_element_type=jnp.float32)
    y = y + bp_ref[...] + x_ref[...]

    # Per-channel batch stats from running sums (biased variance, single pass).
    mean = jnp.sum(y, axis=1, keepdims=True) * inv_count             # (C, 1)
    msq = jnp.sum(y * y, axis=1, keepdims=True) * inv_count
    var = msq - mean * mean
    scl = jax.lax.rsqrt(var + eps) * gamma_ref[...]
    o_ref[...] = (y - mean) * scl + beta_ref[...]


def self_attention_forward(x, params, heads):
    """Pallas implementation of SelfAttention.forward for NCHW input x."""
    wq, bq, wk, bk, wv, bv, wp, bp, gamma, beta = params
    b, c, h, w = x.shape
    assert c % heads == 0
    n = h * w
    d = c // heads
    scale = float(d) ** (-0.5)

    xf = x.reshape(b, c, n).astype(jnp.float32)
    x_bf = xf.astype(jnp.bfloat16)

    # Fused QKV parameters: one (3C, C) weight (bf16 for the MXU), one (3C, 1)
    # f32 bias.
    wqkv = jnp.concatenate([wq, wk, wv], axis=0).astype(jnp.bfloat16)
    bqkv = jnp.concatenate([bq, bk, bv], axis=0).reshape(3 * c, 1).astype(jnp.float32)

    # Kernel 1: fused QKV + attention, gridded over batch (megacore parallel).
    # Weight / bias blocks have a constant index_map -> Pallas keeps them
    # resident (no re-DMA across grid steps).
    attn_t = pl.pallas_call(
        functools.partial(_attn_kernel, heads=heads, scale=scale),
        out_shape=jax.ShapeDtypeStruct((b, c, n), jnp.float32),
        grid=(b,),
        in_specs=[pl.BlockSpec((1, c, n), lambda i: (i, 0, 0)),
                  pl.BlockSpec((3 * c, c), lambda i: (0, 0)),
                  pl.BlockSpec((3 * c, 1), lambda i: (0, 0))],
        out_specs=pl.BlockSpec((1, c, n), lambda i: (i, 0, 0)),
        compiler_params=pltpu.CompilerParams(
            dimension_semantics=("parallel",)),
    )(x_bf, wqkv, bqkv)

    # torch `out.view(b, c, h, w)`: undo the per-head transpose, then the raw
    # row-major regrouping (exact torch semantics); also merge batch onto the
    # lane axis for the lane-dense proj+BN kernel. Pure layout glue, done by XLA.
    a_view = (attn_t.reshape(b, heads, d, n)
              .transpose(0, 1, 3, 2)           # -> (b, heads, n, d) == torch out
              .reshape(b, c, n))               # == torch .view(b, c, h*w)
    a2 = a_view.transpose(1, 0, 2).reshape(c, b * n)
    x2 = xf.transpose(1, 0, 2).reshape(c, b * n)

    col = lambda v_: v_.reshape(c, 1).astype(jnp.float32)
    full2 = pl.BlockSpec((c, b * n), lambda i: (0, 0))
    cvec = pl.BlockSpec((c, 1), lambda i: (0, 0))

    # Kernel 2: proj + residual + train-mode BatchNorm (needs whole-batch stats).
    y2 = pl.pallas_call(
        functools.partial(_proj_bn_kernel, eps=1e-5, inv_count=1.0 / (b * n)),
        out_shape=jax.ShapeDtypeStruct((c, b * n), jnp.float32),
        grid=(1,),
        in_specs=[full2, full2,
                  pl.BlockSpec((c, c), lambda i: (0, 0)),
                  cvec, cvec, cvec],
        out_specs=full2,
        compiler_params=pltpu.CompilerParams(
            dimension_semantics=("arbitrary",)),
    )(a2, x2, wp.astype(jnp.float32), col(bp), col(gamma), col(beta))
    # TODO(synk): for large B*N, split kernel 2 into a gridded partial-sum pass
    # + normalize pass so both v7x TensorCores are used and VMEM stays bounded.

    return y2.reshape(c, b, n).transpose(1, 0, 2).reshape(b, c, h, w)


def init_params(key, c):
    """Deterministic init matching the module's parameter shapes.

    Conv2d(c, c, 1) weights are (c, c) (kernel-size-1 squeezed), biases (c,).
    BatchNorm2d: weight=1, bias=0 (PyTorch defaults).
    """
    ks = jax.random.split(key, 8)
    bound = 1.0 / np.sqrt(c)
    u = lambda k, shape: jax.random.uniform(k, shape, jnp.float32, -bound, bound)
    wq, bq = u(ks[0], (c, c)), u(ks[1], (c,))
    wk, bk = u(ks[2], (c, c)), u(ks[3], (c,))
    wv, bv = u(ks[4], (c, c)), u(ks[5], (c,))
    wp, bp = u(ks[6], (c, c)), u(ks[7], (c,))
    gamma = jnp.ones((c,), jnp.float32)
    beta = jnp.zeros((c,), jnp.float32)
    return (wq, bq, wk, bk, wv, bv, wp, bp, gamma, beta)


def reference(x, params, heads):
    """Pure-JAX reference mirroring the PyTorch forward (train mode)."""
    wq, bq, wk, bk, wv, bv, wp, bp, gamma, beta = params
    b, c, h, w = x.shape
    n = h * w
    d = c // heads
    scale = float(d) ** (-0.5)
    hp = jax.lax.Precision.HIGHEST
    xf = x.reshape(b, c, n)

    conv = lambda wm, bm: (jnp.einsum('oc,bcn->bon', wm, xf, precision=hp)
                           + bm[None, :, None])
    q = conv(wq, bq).reshape(b, heads, d, n)
    k = conv(wk, bk).reshape(b, heads, d, n)
    v = conv(wv, bv).reshape(b, heads, d, n)

    attn = jnp.einsum('bhdq,bhdk->bhqk', q, k, precision=hp) * scale
    attn = jax.nn.softmax(attn, axis=-1)
    out = jnp.einsum('bhqk,bhdk->bhqd', attn, v, precision=hp)
    out = out.reshape(b, c, n)                      # == torch .view(b, c, h, w)

    y = jnp.einsum('oc,bcn->bon', wp, out, precision=hp) + bp[None, :, None] + xf
    mean = y.mean(axis=(0, 2), keepdims=True)
    var = ((y - mean) ** 2).mean(axis=(0, 2), keepdims=True)
    yn = (y - mean) / jnp.sqrt(var + 1e-5) * gamma[None, :, None] + beta[None, :, None]
    return yn.reshape(b, c, h, w)


if __name__ == "__main__":
    B, C, H, W, HEADS = 2, 64, 8, 8, 8
    key = jax.random.PRNGKey(0)
    kx, kp = jax.random.split(key)
    x = jax.random.normal(kx, (B, C, H, W), jnp.float32)
    params = init_params(kp, C)

    y = self_attention_forward(x, params, HEADS)
    y = jax.block_until_ready(y)

    y_ref = reference(x, params, HEADS)
    err = float(jnp.max(jnp.abs(y - y_ref)))
    # bf16 MXU operands (f32 accumulation, f32 softmax/proj/BN) -> ~5e-3 max.
    assert y.shape == (B, C, H, W) and np.isfinite(err) and err < 1e-2, \
        f"max abs err {err}"
    print("KERNEL_OK")
</pallas_src>

<mosaic_0001>
module attributes {stable_mosaic.version = 11 : i64} {
  func.func @_attn_kernel(%arg0: i32, %arg1: memref<1x64x64xbf16, #tpu.memory_space<vmem>>, %arg2: memref<192x64xbf16, #tpu.memory_space<vmem>>, %arg3: memref<192x1xf32, #tpu.memory_space<vmem>>, %arg4: memref<1x64x64xf32, #tpu.memory_space<vmem>>) attributes {dimension_semantics = [#tpu.dimension_semantics<parallel>], iteration_bounds = array<i64: 2>, scalar_prefetch = 0 : i64, scratch_operands = 0 : i64, tpu.core_type = #tpu.core_type<tc>, window_params = [{transform_indices = @transform_0, window_bounds = array<i64: 1, 64, 64>}, {pipeline_mode = #tpu.pipeline_mode<synchronous>, transform_indices = @transform_1, window_bounds = array<i64: 192, 64>}, {pipeline_mode = #tpu.pipeline_mode<synchronous>, transform_indices = @transform_2, window_bounds = array<i64: 192, 1>}, {transform_indices = @transform_3, window_bounds = array<i64: 1, 64, 64>}]} {
    %c0 = arith.constant 0 : index
    %c0_0 = arith.constant 0 : index
    %c0_1 = arith.constant 0 : index
    %0 = vector.load %arg1[%c0, %c0_0, %c0_1] : memref<1x64x64xbf16, #tpu.memory_space<vmem>>, vector<1x64x64xbf16>
    %1 = vector.shape_cast %0 : vector<1x64x64xbf16> to vector<64x64xbf16>
    %c0_2 = arith.constant 0 : index
    %c0_3 = arith.constant 0 : index
    %2 = vector.load %arg2[%c0_2, %c0_3] : memref<192x64xbf16, #tpu.memory_space<vmem>>, vector<192x64xbf16>
    %cst = arith.constant dense<0.000000e+00> : vector<192x64xf32>
    %3 = tpu.matmul %2, %1, %cst {dimension_numbers = #tpu.dot_dimension_numbers<[1], [0], [0], [1], [0, 0, 1, 1], [], []>} : vector<192x64xbf16>, vector<64x64xbf16>, vector<192x64xf32> -> vector<192x64xf32>
    %c0_4 = arith.constant 0 : index
    %c0_5 = arith.constant 0 : index
    %4 = vector.load %arg3[%c0_4, %c0_5] : memref<192x1xf32, #tpu.memory_space<vmem>>, vector<192x1xf32>
    %5 = vector.broadcast %4 : vector<192x1xf32> to vector<192x64xf32>
    %6 = arith.addf %3, %5 : vector<192x64xf32>
    %7 = vector.extract_strided_slice %6 {offsets = [0, 0], sizes = [64, 64], strides = [1, 1]} : vector<192x64xf32> to vector<64x64xf32>
    %cst_6 = arith.constant 0.353553385 : f32
    %8 = vector.broadcast %cst_6 : f32 to vector<64x64xf32>
    %9 = arith.mulf %7, %8 : vector<64x64xf32>
    %10 = vector.extract_strided_slice %6 {offsets = [64, 0], sizes = [64, 64], strides = [1, 1]} : vector<192x64xf32> to vector<64x64xf32>
    %11 = vector.extract_strided_slice %6 {offsets = [128, 0], sizes = [64, 64], strides = [1, 1]} : vector<192x64xf32> to vector<64x64xf32>
    %12 = vector.extract_strided_slice %9 {offsets = [0, 0], sizes = [8, 64], strides = [1, 1]} : vector<64x64xf32> to vector<8x64xf32>
    %13 = arith.truncf %12 : vector<8x64xf32> to vector<8x64xbf16>
    %14 = vector.extract_strided_slice %10 {offsets = [0, 0], sizes = [8, 64], strides = [1, 1]} : vector<64x64xf32> to vector<8x64xf32>
    %15 = arith.truncf %14 : vector<8x64xf32> to vector<8x64xbf16>
    %16 = vector.extract_strided_slice %11 {offsets = [0, 0], sizes = [8, 64], strides = [1, 1]} : vector<64x64xf32> to vector<8x64xf32>
    %17 = arith.truncf %16 : vector<8x64xf32> to vector<8x64xbf16>
    %cst_7 = arith.constant dense<0.000000e+00> : vector<64x64xf32>
    %18 = tpu.matmul %13, %15, %cst_7 {dimension_numbers = #tpu.dot_dimension_numbers<[0], [0], [1], [1], [0, 1, 1, 1], [], []>} : vector<8x64xbf16>, vector<8x64xbf16>, vector<64x64xf32> -> vector<64x64xf32>
    %cst_8 = arith.constant dense<0xFF800000> : vector<64xf32>
    %19 = vector.multi_reduction <maximumf>, %18, %cst_8 [1] : vector<64x64xf32> to vector<64xf32>
    %20 = vector.shape_cast %19 : vector<64xf32> to vector<64x1xf32>
    %21 = vector.broadcast %20 : vector<64x1xf32> to vector<64x64xf32>
    %22 = arith.subf %18, %21 : vector<64x64xf32>
    %23 = math.exp %22 : vector<64x64xf32>
    %cst_9 = arith.constant dense<0.000000e+00> : vector<64xf32>
    %24 = vector.multi_reduction <add>, %23, %cst_9 [1] : vector<64x64xf32> to vector<64xf32>
    %25 = vector.shape_cast %24 : vector<64xf32> to vector<64x1xf32>
    %26 = tpu.reciprocal %25 {approx = true} : vector<64x1xf32> -> vector<64x1xf32>
    %27 = vector.broadcast %26 : vector<64x1xf32> to vector<64x64xf32>
    %28 = arith.mulf %23, %27 : vector<64x64xf32>
    %29 = arith.truncf %28 : vector<64x64xf32> to vector<64x64xbf16>
    %cst_10 = arith.constant dense<0.000000e+00> : vector<8x64xf32>
    %30 = tpu.matmul %17, %29, %cst_10 {dimension_numbers = #tpu.dot_dimension_numbers<[1], [1], [0], [0], [0, 0, 1, 0], [], []>} : vector<8x64xbf16>, vector<64x64xbf16>, vector<8x64xf32> -> vector<8x64xf32>
    %c0_11 = arith.constant 0 : index
    %c0_12 = arith.constant 0 : index
    %c0_13 = arith.constant 0 : index
    %31 = vector.load %arg4[%c0_11, %c0_12, %c0_13] : memref<1x64x64xf32, #tpu.memory_space<vmem>>, vector<1x8x64xf32>
    %32 = vector.shape_cast %31 : vector<1x8x64xf32> to vector<8x64xf32>
    %33 = vector.shape_cast %30 : vector<8x64xf32> to vector<1x8x64xf32>
    tpu.vector_store %arg4[%c0_11, %c0_12, %c0_13], %33 {strides = array<i32>} : memref<1x64x64xf32, #tpu.memory_space<vmem>>, vector<1x8x64xf32>,
    %34 = vector.extract_strided_slice %9 {offsets = [8, 0], sizes = [8, 64], strides = [1, 1]} : vector<64x64xf32> to vector<8x64xf32>
    %35 = arith.truncf %34 : vector<8x64xf32> to vector<8x64xbf16>
    %36 = vector.extract_strided_slice %10 {offsets = [8, 0], sizes = [8, 64], strides = [1, 1]} : vector<64x64xf32> to vector<8x64xf32>
    %37 = arith.truncf %36 : vector<8x64xf32> to vector<8x64xbf16>
    %38 = vector.extract_strided_slice %11 {offsets = [8, 0], sizes = [8, 64], strides = [1, 1]} : vector<64x64xf32> to vector<8x64xf32>
    %39 = arith.truncf %38 : vector<8x64xf32> to vector<8x64xbf16>
    %cst_14 = arith.constant dense<0.000000e+00> : vector<64x64xf32>
    %40 = tpu.matmul %35, %37, %cst_14 {dimension_numbers = #tpu.dot_dimension_numbers<[0], [0], [1], [1], [0, 1, 1, 1], [], []>} : vector<8x64xbf16>, vector<8x64xbf16>, vector<64x64xf32> -> vector<64x64xf32>
    %cst_15 = arith.constant dense<0xFF800000> : vector<64xf32>
    %41 = vector.multi_reduction <maximumf>, %40, %cst_15 [1] : vector<64x64xf32> to vector<64xf32>
    %42 = vector.shape_cast %41 : vector<64xf32> to vector<64x1xf32>
    %43 = vector.broadcast %42 : vector<64x1xf32> to vector<64x64xf32>
    %44 = arith.subf %40, %43 : vector<64x64xf32>
    %45 = math.exp %44 : vector<64x64xf32>
    %cst_16 = arith.constant dense<0.000000e+00> : vector<64xf32>
    %46 = vector.multi_reduction <add>, %45, %cst_16 [1] : vector<64x64xf32> to vector<64xf32>
    %47 = vector.shape_cast %46 : vector<64xf32> to vector<64x1xf32>
    %48 = tpu.reciprocal %47 {approx = true} : vector<64x1xf32> -> vector<64x1xf32>
    %49 = vector.broadcast %48 : vector<64x1xf32> to vector<64x64xf32>
    %50 = arith.mulf %45, %49 : vector<64x64xf32>
    %51 = arith.truncf %50 : vector<64x64xf32> to vector<64x64xbf16>
    %cst_17 = arith.constant dense<0.000000e+00> : vector<8x64xf32>
    %52 = tpu.matmul %39, %51, %cst_17 {dimension_numbers = #tpu.dot_dimension_numbers<[1], [1], [0], [0], [0, 0, 1, 0], [], []>} : vector<8x64xbf16>, vector<64x64xbf16>, vector<8x64xf32> -> vector<8x64xf32>
    %c0_18 = arith.constant 0 : index
    %c8 = arith.constant 8 : index
    %c0_19 = arith.constant 0 : index
    %53 = vector.load %arg4[%c0_18, %c8, %c0_19] : memref<1x64x64xf32, #tpu.memory_space<vmem>>, vector<1x8x64xf32>
    %54 = vector.shape_cast %53 : vector<1x8x64xf32> to vector<8x64xf32>
    %55 = vector.shape_cast %52 : vector<8x64xf32> to vector<1x8x64xf32>
    tpu.vector_store %arg4[%c0_18, %c8, %c0_19], %55 {strides = array<i32>} : memref<1x64x64xf32, #tpu.memory_space<vmem>>, vector<1x8x64xf32>,
    %56 = vector.extract_strided_slice %9 {offsets = [16, 0], sizes = [8, 64], strides = [1, 1]} : vector<64x64xf32> to vector<8x64xf32>
    %57 = arith.truncf %56 : vector<8x64xf32> to vector<8x64xbf16>
    %58 = vector.extract_strided_slice %10 {offsets = [16, 0], sizes = [8, 64], strides = [1, 1]} : vector<64x64xf32> to vector<8x64xf32>
    %59 = arith.truncf %58 : vector<8x64xf32> to vector<8x64xbf16>
    %60 = vector.extract_strided_slice %11 {offsets = [16, 0], sizes = [8, 64], strides = [1, 1]} : vector<64x64xf32> to vector<8x64xf32>
    %61 = arith.truncf %60 : vector<8x64xf32> to vector<8x64xbf16>
    %cst_20 = arith.constant dense<0.000000e+00> : vector<64x64xf32>
    %62 = tpu.matmul %57, %59, %cst_20 {dimension_numbers = #tpu.dot_dimension_numbers<[0], [0], [1], [1], [0, 1, 1, 1], [], []>} : vector<8x64xbf16>, vector<8x64xbf16>, vector<64x64xf32> -> vector<64x64xf32>
    %cst_21 = arith.constant dense<0xFF800000> : vector<64xf32>
    %63 = vector.multi_reduction <maximumf>, %62, %cst_21 [1] : vector<64x64xf32> to vector<64xf32>
    %64 = vector.shape_cast %63 : vector<64xf32> to vector<64x1xf32>
    %65 = vector.broadcast %64 : vector<64x1xf32> to vector<64x64xf32>
    %66 = arith.subf %62, %65 : vector<64x64xf32>
    %67 = math.exp %66 : vector<64x64xf32>
    %cst_22 = arith.constant dense<0.000000e+00> : vector<64xf32>
    %68 = vector.multi_reduction <add>, %67, %cst_22 [1] : vector<64x64xf32> to vector<64xf32>
    %69 = vector.shape_cast %68 : vector<64xf32> to vector<64x1xf32>
    %70 = tpu.reciprocal %69 {approx = true} : vector<64x1xf32> -> vector<64x1xf32>
    %71 = vector.broadcast %70 : vector<64x1xf32> to vector<64x64xf32>
    %72 = arith.mulf %67, %71 : vector<64x64xf32>
    %73 = arith.truncf %72 : vector<64x64xf32> to vector<64x64xbf16>
    %cst_23 = arith.constant dense<0.000000e+00> : vector<8x64xf32>
    %74 = tpu.matmul %61, %73, %cst_23 {dimension_numbers = #tpu.dot_dimension_numbers<[1], [1], [0], [0], [0, 0, 1, 0], [], []>} : vector<8x64xbf16>, vector<64x64xbf16>, vector<8x64xf32> -> vector<8x64xf32>
    %c0_24 = arith.constant 0 : index
    %c16 = arith.constant 16 : index
    %c0_25 = arith.constant 0 : index
    %75 = vector.load %arg4[%c0_24, %c16, %c0_25] : memref<1x64x64xf32, #tpu.memory_space<vmem>>, vector<1x8x64xf32>
    %76 = vector.shape_cast %75 : vector<1x8x64xf32> to vector<8x64xf32>
    %77 = vector.shape_cast %74 : vector<8x64xf32> to vector<1x8x64xf32>
    tpu.vector_store %arg4[%c0_24, %c16, %c0_25], %77 {strides = array<i32>} : memref<1x64x64xf32, #tpu.memory_space<vmem>>, vector<1x8x64xf32>,
    %78 = vector.extract_strided_slice %9 {offsets = [24, 0], sizes = [8, 64], strides = [1, 1]} : vector<64x64xf32> to vector<8x64xf32>
    %79 = arith.truncf %78 : vector<8x64xf32> to vector<8x64xbf16>
    %80 = vector.extract_strided_slice %10 {offsets = [24, 0], sizes = [8, 64], strides = [1, 1]} : vector<64x64xf32> to vector<8x64xf32>
    %81 = arith.truncf %80 : vector<8x64xf32> to vector<8x64xbf16>
    %82 = vector.extract_strided_slice %11 {offsets = [24, 0], sizes = [8, 64], strides = [1, 1]} : vector<64x64xf32> to vector<8x64xf32>
    %83 = arith.truncf %82 : vector<8x64xf32> to vector<8x64xbf16>
    %cst_26 = arith.constant dense<0.000000e+00> : vector<64x64xf32>
    %84 = tpu.matmul %79, %81, %cst_26 {dimension_numbers = #tpu.dot_dimension_numbers<[0], [0], [1], [1], [0, 1, 1, 1], [], []>} : vector<8x64xbf16>, vector<8x64xbf16>, vector<64x64xf32> -> vector<64x64xf32>
    %cst_27 = arith.constant dense<0xFF800000> : vector<64xf32>
    %85 = vector.multi_reduction <maximumf>, %84, %cst_27 [1] : vector<64x64xf32> to vector<64xf32>
    %86 = vector.shape_cast %85 : vector<64xf32> to vector<64x1xf32>
    %87 = vector.broadcast %86 : vector<64x1xf32> to vector<64x64xf32>
    %88 = arith.subf %84, %87 : vector<64x64xf32>
    %89 = math.exp %88 : vector<64x64xf32>
    %cst_28 = arith.constant dense<0.000000e+00> : vector<64xf32>
    %90 = vector.multi_reduction <add>, %89, %cst_28 [1] : vector<64x64xf32> to vector<64xf32>
    %91 = vector.shape_cast %90 : vector<64xf32> to vector<64x1xf32>
    %92 = tpu.reciprocal %91 {approx = true} : vector<64x1xf32> -> vector<64x1xf32>
    %93 = vector.broadcast %92 : vector<64x1xf32> to vector<64x64xf32>
    %94 = arith.mulf %89, %93 : vector<64x64xf32>
    %95 = arith.truncf %94 : vector<64x64xf32> to vector<64x64xbf16>
    %cst_29 = arith.constant dense<0.000000e+00> : vector<8x64xf32>
    %96 = tpu.matmul %83, %95, %cst_29 {dimension_numbers = #tpu.dot_dimension_numbers<[1], [1], [0], [0], [0, 0, 1, 0], [], []>} : vector<8x64xbf16>, vector<64x64xbf16>, vector<8x64xf32> -> vector<8x64xf32>
    %c0_30 = arith.constant 0 : index
    %c24 = arith.constant 24 : index
    %c0_31 = arith.constant 0 : index
    %97 = vector.load %arg4[%c0_30, %c24, %c0_31] : memref<1x64x64xf32, #tpu.memory_space<vmem>>, vector<1x8x64xf32>
    %98 = vector.shape_cast %97 : vector<1x8x64xf32> to vector<8x64xf32>
    %99 = vector.shape_cast %96 : vector<8x64xf32> to vector<1x8x64xf32>
    tpu.vector_store %arg4[%c0_30, %c24, %c0_31], %99 {strides = array<i32>} : memref<1x64x64xf32, #tpu.memory_space<vmem>>, vector<1x8x64xf32>,
    %100 = vector.extract_strided_slice %9 {offsets = [32, 0], sizes = [8, 64], strides = [1, 1]} : vector<64x64xf32> to vector<8x64xf32>
    %101 = arith.truncf %100 : vector<8x64xf32> to vector<8x64xbf16>
    %102 = vector.extract_strided_slice %10 {offsets = [32, 0], sizes = [8, 64], strides = [1, 1]} : vector<64x64xf32> to vector<8x64xf32>
    %103 = arith.truncf %102 : vector<8x64xf32> to vector<8x64xbf16>
    %104 = vector.extract_strided_slice %11 {offsets = [32, 0], sizes = [8, 64], strides = [1, 1]} : vector<64x64xf32> to vector<8x64xf32>
    %105 = arith.truncf %104 : vector<8x64xf32> to vector<8x64xbf16>
    %cst_32 = arith.constant dense<0.000000e+00> : vector<64x64xf32>
    %106 = tpu.matmul %101, %103, %cst_32 {dimension_numbers = #tpu.dot_dimension_numbers<[0], [0], [1], [1], [0, 1, 1, 1], [], []>} : vector<8x64xbf16>, vector<8x64xbf16>, vector<64x64xf32> -> vector<64x64xf32>
    %cst_33 = arith.constant dense<0xFF800000> : vector<64xf32>
    %107 = vector.multi_reduction <maximumf>, %106, %cst_33 [1] : vector<64x64xf32> to vector<64xf32>
    %108 = vector.shape_cast %107 : vector<64xf32> to vector<64x1xf32>
    %109 = vector.broadcast %108 : vector<64x1xf32> to vector<64x64xf32>
    %110 = arith.subf %106, %109 : vector<64x64xf32>
    %111 = math.exp %110 : vector<64x64xf32>
    %cst_34 = arith.constant dense<0.000000e+00> : vector<64xf32>
    %112 = vector.multi_reduction <add>, %111, %cst_34 [1] : vector<64x64xf32> to vector<64xf32>
    %113 = vector.shape_cast %112 : vector<64xf32> to vector<64x1xf32>
    %114 = tpu.reciprocal %113 {approx = true} : vector<64x1xf32> -> vector<64x1xf32>
    %115 = vector.broadcast %114 : vector<64x1xf32> to vector<64x64xf32>
    %116 = arith.mulf %111, %115 : vector<64x64xf32>
    %117 = arith.truncf %116 : vector<64x64xf32> to vector<64x64xbf16>
    %cst_35 = arith.constant dense<0.000000e+00> : vector<8x64xf32>
    %118 = tpu.matmul %105, %117, %cst_35 {dimension_numbers = #tpu.dot_dimension_numbers<[1], [1], [0], [0], [0, 0, 1, 0], [], []>} : vector<8x64xbf16>, vector<64x64xbf16>, vector<8x64xf32> -> vector<8x64xf32>
    %c0_36 = arith.constant 0 : index
    %c32 = arith.constant 32 : index
    %c0_37 = arith.constant 0 : index
    %119 = vector.load %arg4[%c0_36, %c32, %c0_37] : memref<1x64x64xf32, #tpu.memory_space<vmem>>, vector<1x8x64xf32>
    %120 = vector.shape_cast %119 : vector<1x8x64xf32> to vector<8x64xf32>
    %121 = vector.shape_cast %118 : vector<8x64xf32> to vector<1x8x64xf32>
    tpu.vector_store %arg4[%c0_36, %c32, %c0_37], %121 {strides = array<i32>} : memref<1x64x64xf32, #tpu.memory_space<vmem>>, vector<1x8x64xf32>,
    %122 = vector.extract_strided_slice %9 {offsets = [40, 0], sizes = [8, 64], strides = [1, 1]} : vector<64x64xf32> to vector<8x64xf32>
    %123 = arith.truncf %122 : vector<8x64xf32> to vector<8x64xbf16>
    %124 = vector.extract_strided_slice %10 {offsets = [40, 0], sizes = [8, 64], strides = [1, 1]} : vector<64x64xf32> to vector<8x64xf32>
    %125 = arith.truncf %124 : vector<8x64xf32> to vector<8x64xbf16>
    %126 = vector.extract_strided_slice %11 {offsets = [40, 0], sizes = [8, 64], strides = [1, 1]} : vector<64x64xf32> to vector<8x64xf32>
    %127 = arith.truncf %126 : vector<8x64xf32> to vector<8x64xbf16>
    %cst_38 = arith.constant dense<0.000000e+00> : vector<64x64xf32>
    %128 = tpu.matmul %123, %125, %cst_38 {dimension_numbers = #tpu.dot_dimension_numbers<[0], [0], [1], [1], [0, 1, 1, 1], [], []>} : vector<8x64xbf16>, vector<8x64xbf16>, vector<64x64xf32> -> vector<64x64xf32>
    %cst_39 = arith.constant dense<0xFF800000> : vector<64xf32>
    %129 = vector.multi_reduction <maximumf>, %128, %cst_39 [1] : vector<64x64xf32> to vector<64xf32>
    %130 = vector.shape_cast %129 : vector<64xf32> to vector<64x1xf32>
    %131 = vector.broadcast %130 : vector<64x1xf32> to vector<64x64xf32>
    %132 = arith.subf %128, %131 : vector<64x64xf32>
    %133 = math.exp %132 : vector<64x64xf32>
    %cst_40 = arith.constant dense<0.000000e+00> : vector<64xf32>
    %134 = vector.multi_reduction <add>, %133, %cst_40 [1] : vector<64x64xf32> to vector<64xf32>
    %135 = vector.shape_cast %134 : vector<64xf32> to vector<64x1xf32>
    %136 = tpu.reciprocal %135 {approx = true} : vector<64x1xf32> -> vector<64x1xf32>
    %137 = vector.broadcast %136 : vector<64x1xf32> to vector<64x64xf32>
    %138 = arith.mulf %133, %137 : vector<64x64xf32>
    %139 = arith.truncf %138 : vector<64x64xf32> to vector<64x64xbf16>
    %cst_41 = arith.constant dense<0.000000e+00> : vector<8x64xf32>
    %140 = tpu.matmul %127, %139, %cst_41 {dimension_numbers = #tpu.dot_dimension_numbers<[1], [1], [0], [0], [0, 0, 1, 0], [], []>} : vector<8x64xbf16>, vector<64x64xbf16>, vector<8x64xf32> -> vector<8x64xf32>
    %c0_42 = arith.constant 0 : index
    %c40 = arith.constant 40 : index
    %c0_43 = arith.constant 0 : index
    %141 = vector.load %arg4[%c0_42, %c40, %c0_43] : memref<1x64x64xf32, #tpu.memory_space<vmem>>, vector<1x8x64xf32>
    %142 = vector.shape_cast %141 : vector<1x8x64xf32> to vector<8x64xf32>
    %143 = vector.shape_cast %140 : vector<8x64xf32> to vector<1x8x64xf32>
    tpu.vector_store %arg4[%c0_42, %c40, %c0_43], %143 {strides = array<i32>} : memref<1x64x64xf32, #tpu.memory_space<vmem>>, vector<1x8x64xf32>,
    %144 = vector.extract_strided_slice %9 {offsets = [48, 0], sizes = [8, 64], strides = [1, 1]} : vector<64x64xf32> to vector<8x64xf32>
    %145 = arith.truncf %144 : vector<8x64xf32> to vector<8x64xbf16>
    %146 = vector.extract_strided_slice %10 {offsets = [48, 0], sizes = [8, 64], strides = [1, 1]} : vector<64x64xf32> to vector<8x64xf32>
    %147 = arith.truncf %146 : vector<8x64xf32> to vector<8x64xbf16>
    %148 = vector.extract_strided_slice %11 {offsets = [48, 0], sizes = [8, 64], strides = [1, 1]} : vector<64x64xf32> to vector<8x64xf32>
    %149 = arith.truncf %148 : vector<8x64xf32> to vector<8x64xbf16>
    %cst_44 = arith.constant dense<0.000000e+00> : vector<64x64xf32>
    %150 = tpu.matmul %145, %147, %cst_44 {dimension_numbers = #tpu.dot_dimension_numbers<[0], [0], [1], [1], [0, 1, 1, 1], [], []>} : vector<8x64xbf16>, vector<8x64xbf16>, vector<64x64xf32> -> vector<64x64xf32>
    %cst_45 = arith.constant dense<0xFF800000> : vector<64xf32>
    %151 = vector.multi_reduction <maximumf>, %150, %cst_45 [1] : vector<64x64xf32> to vector<64xf32>
    %152 = vector.shape_cast %151 : vector<64xf32> to vector<64x1xf32>
    %153 = vector.broadcast %152 : vector<64x1xf32> to vector<64x64xf32>
    %154 = arith.subf %150, %153 : vector<64x64xf32>
    %155 = math.exp %154 : vector<64x64xf32>
    %cst_46 = arith.constant dense<0.000000e+00> : vector<64xf32>
    %156 = vector.multi_reduction <add>, %155, %cst_46 [1] : vector<64x64xf32> to vector<64xf32>
    %157 = vector.shape_cast %156 : vector<64xf32> to vector<64x1xf32>
    %158 = tpu.reciprocal %157 {approx = true} : vector<64x1xf32> -> vector<64x1xf32>
    %159 = vector.broadcast %158 : vector<64x1xf32> to vector<64x64xf32>
    %160 = arith.mulf %155, %159 : vector<64x64xf32>
    %161 = arith.truncf %160 : vector<64x64xf32> to vector<64x64xbf16>
    %cst_47 = arith.constant dense<0.000000e+00> : vector<8x64xf32>
    %162 = tpu.matmul %149, %161, %cst_47 {dimension_numbers = #tpu.dot_dimension_numbers<[1], [1], [0], [0], [0, 0, 1, 0], [], []>} : vector<8x64xbf16>, vector<64x64xbf16>, vector<8x64xf32> -> vector<8x64xf32>
    %c0_48 = arith.constant 0 : index
    %c48 = arith.constant 48 : index
    %c0_49 = arith.constant 0 : index
    %163 = vector.load %arg4[%c0_48, %c48, %c0_49] : memref<1x64x64xf32, #tpu.memory_space<vmem>>, vector<1x8x64xf32>
    %164 = vector.shape_cast %163 : vector<1x8x64xf32> to vector<8x64xf32>
    %165 = vector.shape_cast %162 : vector<8x64xf32> to vector<1x8x64xf32>
    tpu.vector_store %arg4[%c0_48, %c48, %c0_49], %165 {strides = array<i32>} : memref<1x64x64xf32, #tpu.memory_space<vmem>>, vector<1x8x64xf32>,
    %166 = vector.extract_strided_slice %9 {offsets = [56, 0], sizes = [8, 64], strides = [1, 1]} : vector<64x64xf32> to vector<8x64xf32>
    %167 = arith.truncf %166 : vector<8x64xf32> to vector<8x64xbf16>
    %168 = vector.extract_strided_slice %10 {offsets = [56, 0], sizes = [8, 64], strides = [1, 1]} : vector<64x64xf32> to vector<8x64xf32>
    %169 = arith.truncf %168 : vector<8x64xf32> to vector<8x64xbf16>
    %170 = vector.extract_strided_slice %11 {offsets = [56, 0], sizes = [8, 64], strides = [1, 1]} : vector<64x64xf32> to vector<8x64xf32>
    %171 = arith.truncf %170 : vector<8x64xf32> to vector<8x64xbf16>
    %cst_50 = arith.constant dense<0.000000e+00> : vector<64x64xf32>
    %172 = tpu.matmul %167, %169, %cst_50 {dimension_numbers = #tpu.dot_dimension_numbers<[0], [0], [1], [1], [0, 1, 1, 1], [], []>} : vector<8x64xbf16>, vector<8x64xbf16>, vector<64x64xf32> -> vector<64x64xf32>
    %cst_51 = arith.constant dense<0xFF800000> : vector<64xf32>
    %173 = vector.multi_reduction <maximumf>, %172, %cst_51 [1] : vector<64x64xf32> to vector<64xf32>
    %174 = vector.shape_cast %173 : vector<64xf32> to vector<64x1xf32>
    %175 = vector.broadcast %174 : vector<64x1xf32> to vector<64x64xf32>
    %176 = arith.subf %172, %175 : vector<64x64xf32>
    %177 = math.exp %176 : vector<64x64xf32>
    %cst_52 = arith.constant dense<0.000000e+00> : vector<64xf32>
    %178 = vector.multi_reduction <add>, %177, %cst_52 [1] : vector<64x64xf32> to vector<64xf32>
    %179 = vector.shape_cast %178 : vector<64xf32> to vector<64x1xf32>
    %180 = tpu.reciprocal %179 {approx = true} : vector<64x1xf32> -> vector<64x1xf32>
    %181 = vector.broadcast %180 : vector<64x1xf32> to vector<64x64xf32>
    %182 = arith.mulf %177, %181 : vector<64x64xf32>
    %183 = arith.truncf %182 : vector<64x64xf32> to vector<64x64xbf16>
    %cst_53 = arith.constant dense<0.000000e+00> : vector<8x64xf32>
    %184 = tpu.matmul %171, %183, %cst_53 {dimension_numbers = #tpu.dot_dimension_numbers<[1], [1], [0], [0], [0, 0, 1, 0], [], []>} : vector<8x64xbf16>, vector<64x64xbf16>, vector<8x64xf32> -> vector<8x64xf32>
    %c0_54 = arith.constant 0 : index
    %c56 = arith.constant 56 : index
    %c0_55 = arith.constant 0 : index
    %185 = vector.load %arg4[%c0_54, %c56, %c0_55] : memref<1x64x64xf32, #tpu.memory_space<vmem>>, vector<1x8x64xf32>
    %186 = vector.shape_cast %185 : vector<1x8x64xf32> to vector<8x64xf32>
    %187 = vector.shape_cast %184 : vector<8x64xf32> to vector<1x8x64xf32>
    tpu.vector_store %arg4[%c0_54, %c56, %c0_55], %187 {strides = array<i32>} : memref<1x64x64xf32, #tpu.memory_space<vmem>>, vector<1x8x64xf32>,
    return
  }
  func.func @transform_0(%arg0: i32) -> (i32, i32, i32) {
    %c0_i32 = arith.constant 0 : i32
    %c0_i32_0 = arith.constant 0 : i32
    %c0_i32_1 = arith.constant 0 : i32
    return %arg0, %c0_i32, %c0_i32_0 : i32, i32, i32
  }
  func.func @transform_1(%arg0: i32) -> (i32, i32) {
    %c0_i32 = arith.constant 0 : i32
    %c0_i32_0 = arith.constant 0 : i32
    %c0_i32_1 = arith.constant 0 : i32
    return %c0_i32, %c0_i32_0 : i32, i32
  }
  func.func @transform_2(%arg0: i32) -> (i32, i32) {
    %c0_i32 = arith.constant 0 : i32
    %c0_i32_0 = arith.constant 0 : i32
    %c0_i32_1 = arith.constant 0 : i32
    return %c0_i32, %c0_i32_0 : i32, i32
  }
  func.func @transform_3(%arg0: i32) -> (i32, i32, i32) {
    %c0_i32 = arith.constant 0 : i32
    %c0_i32_0 = arith.constant 0 : i32
    %c0_i32_1 = arith.constant 0 : i32
    return %arg0, %c0_i32, %c0_i32_0 : i32, i32, i32
  }
}

</mosaic_0001>

<llo_original>
// kernel: tpu_custom_call.1
$region0: #{tpu_custom_call.1}
  #allocation0 [shape = 'u32[]', space=smem, size = 0x4, offset = 0x4, fixed_abs, tag = 'smem constant byte address 0x4 - core index']
  #allocation1 [shape = 'u32[144,128]{1,0:T(1,128)}', space=vmem, size = 0x12000, scoped, tag = 'internal scratch']
  %s0 = inlined_call_operand.vmem [shape: bf16[2,64,64], index: 0, kind: input, shape index: {}]
  %s1 = inlined_call_operand.vmem [shape: bf16[192,64], index: 1, kind: input, shape index: {}]
  %s2 = inlined_call_operand.vmem [shape: f32[192,1], index: 2, kind: input, shape index: {}]
  %s3 = inlined_call_operand.hbm [shape: f32[2,64,64], index: 3, kind: output, shape index: {}]
  %s4 = sld [smem:[#allocation0]]
  $region45: #{tpu_custom_call.1} parent=0
    _
  %s6 = ssub.s32 1, %s4
  %s7 = scalar_select 0, %s6, %s4
  $region1: #{tpu_custom_call.1} parent=0
    #allocation2 [shape = 'u8[65536]{0}', space=vmem, size = 0x10000, scoped, tag = 'output window, operand 0']
    #allocation3 [shape = 's32[2]{0}', space=sflag, size = 0x8, scoped, tag = 'scoped memory for tpu_custom_call.1']
    %8 = vsyncpa [#allocation3], 0
    %s9 = scalar_lea.sflag [#allocation3], 1
    %10 = vsyncpa %s9, 0
    loop: start=0, step=1, limit=4
    $region2: #{tpu_custom_call.1} parent=1 // loop_pre_header
      _
    $region3: #{tpu_custom_call.1} parent=1 // loop_header
      %s12 = sphi 0, %s16
      %p13 = scmp.ge.s32.totalorder %s12, 4
      %s22 = sphi 0, %s24
      %s25 = sphi 0, %s22
      %s26 = sphi 0, %s25
      %s42 = sphi 0, %s26
      %s46 = sphi 0, %s46
      %s48 = sphi 0, %s46
      %s49 = sphi 0, %s48
      %s63 = sphi 0, %s49
      %s67 = sphi 0, %s67
      %s69 = sphi 0, %s67
      %s70 = sphi 0, %s69
      %s84 = sphi 0, %s70
      %s90 = sphi 0, %s92
      %s93 = sphi 0, %s90
      %s94 = sphi 0, %s93
      %s110 = sphi 0, %s94
    $region4: #{tpu_custom_call.1} parent=1 // loop_header_branch
      %15 = sbr.rel (%p13) target = $region8
    $region5: #{tpu_custom_call.1} parent=1 // loop_body
      %s17 = ssub.s32 %s12, 1
      %s18 = ssub.s32 %s12, 2
      %s19 = sadd.s32 %s12, 1
      %s20 = ssub.s32 %s12, %s19
      %p21 = scmp.eq.s32.totalorder %s20, 0
      %s23 = sadd.s32 %s22, 1
      %s24 = scalar_select %p21, %s22, %s23
      %p27 = pneg %p21
      %p28 = scmp.eq.s32.totalorder %s12, 1
      %p29 = por %p27, %p28
      %p30 = scmp.ne.s32.totalorder %s22, %s25
      %p31 = scmp.eq.s32.totalorder %s12, 0
      %p32 = por %p30, %p31
      %p33 = scmp.ne.s32.totalorder %s22, %s25
      %p34 = scmp.eq.s32.totalorder %s17, 1
      %p35 = por %p33, %p34
      %p36 = scmp.ne.s32.totalorder %s25, %s26
      %p37 = scmp.eq.s32.totalorder %s17, 0
      %p38 = por %p36, %p37
      %p39 = scmp.ne.s32.totalorder %s25, %s26
      %p40 = scmp.eq.s32.totalorder %s18, 1
      %p41 = por %p39, %p40
      %p43 = scmp.ne.s32.totalorder %s26, %s42
      %p44 = scmp.eq.s32.totalorder %s18, 0
      %p45 = por %p43, %p44
      %s47 = sadd.s32 %s46, 1
      %p50 = scmp.eq.s32.totalorder %s12, 1
      %p51 = scmp.ne.s32.totalorder %s46, %s48
      %p52 = scmp.eq.s32.totalorder %s12, 0
      %p53 = por %p51, %p52
      %p54 = scmp.ne.s32.totalorder %s46, %s48
      %p55 = scmp.eq.s32.totalorder %s17, 1
      %p56 = por %p54, %p55
      %p57 = scmp.ne.s32.totalorder %s48, %s49
      %p58 = scmp.eq.s32.totalorder %s17, 0
      %p59 = por %p57, %p58
      %p60 = scmp.ne.s32.totalorder %s48, %s49
      %p61 = scmp.eq.s32.totalorder %s18, 1
      %p62 = por %p60, %p61
      %p64 = scmp.ne.s32.totalorder %s49, %s63
      %p65 = scmp.eq.s32.totalorder %s18, 0
      %p66 = por %p64, %p65
      %s68 = sadd.s32 %s67, 1
      %p71 = scmp.eq.s32.totalorder %s12, 1
      %p72 = scmp.ne.s32.totalorder %s67, %s69
      %p73 = scmp.eq.s32.totalorder %s12, 0
      %p74 = por %p72, %p73
      %p75 = scmp.ne.s32.totalorder %s67, %s69
      %p76 = scmp.eq.s32.totalorder %s17, 1
      %p77 = por %p75, %p76
      %p78 = scmp.ne.s32.totalorder %s69, %s70
      %p79 = scmp.eq.s32.totalorder %s17, 0
      %p80 = por %p78, %p79
      %p81 = scmp.ne.s32.totalorder %s69, %s70
      %p82 = scmp.eq.s32.totalorder %s18, 1
      %p83 = por %p81, %p82
      %p85 = scmp.ne.s32.totalorder %s70, %s84
      %p86 = scmp.eq.s32.totalorder %s18, 0
      %p87 = por %p85, %p86
      %s88 = ssub.s32 %s12, %s19
      %p89 = scmp.eq.s32.totalorder %s88, 0
      %s91 = sadd.s32 %s90, 1
      %s92 = scalar_select %p89, %s90, %s91
      %p95 = pneg %p89
      %p96 = scmp.eq.s32.totalorder %s12, 1
      %p97 = por %p95, %p96
      %p98 = scmp.ne.s32.totalorder %s90, %s93
      %p99 = scmp.eq.s32.totalorder %s12, 0
      %p100 = por %p98, %p99
      %p101 = scmp.ne.s32.totalorder %s90, %s93
      %p102 = scmp.eq.s32.totalorder %s17, 1
      %p103 = por %p101, %p102
      %p104 = scmp.ne.s32.totalorder %s93, %s94
      %p105 = scmp.eq.s32.totalorder %s17, 0
      %p106 = por %p104, %p105
      %p107 = scmp.ne.s32.totalorder %s93, %s94
      %p108 = scmp.eq.s32.totalorder %s18, 1
      %p109 = por %p107, %p108
      %p111 = scmp.ne.s32.totalorder %s94, %s110
      %p112 = scmp.eq.s32.totalorder %s18, 0
      %p113 = por %p111, %p112
      %p114 = scmp.le.s32.totalorder 1, %s12
      %p115 = scmp.lt.s32.totalorder %s12, 3
      %p116 = pnand %p114, %p115
      %p117 = pneg %p116
      // Predicated region
      $region9: #{tpu_custom_call.1} parent=5 // pred_check
        _
      $region10: #{tpu_custom_call.1} parent=5 // pred_check_branch
        %119 = sbr.rel (%p116) target = $region12
      $region11: #{tpu_custom_call.1} parent=5 // pred_region
        %s120 = ssub.s32 %s12, 1
        // Predicated region
        $region13: #{tpu_custom_call.1} parent=11 // pred_check
          %p121 = pneg %p59
        $region14: #{tpu_custom_call.1} parent=11 // pred_check_branch
          %123 = sbr.rel (%p121) target = $region16
        $region15: #{tpu_custom_call.1} parent=11 // pred_region
          _
        $region16: #{tpu_custom_call.1} parent=11 // pred_fallthru
          _
        // Predicated region
        $region17: #{tpu_custom_call.1} parent=11 // pred_check
          %p124 = pneg %p80
        $region18: #{tpu_custom_call.1} parent=11 // pred_check_branch
          %126 = sbr.rel (%p124) target = $region20
        $region19: #{tpu_custom_call.1} parent=11 // pred_region
          _
        $region20: #{tpu_custom_call.1} parent=11 // pred_fallthru
          _
      $region12: #{tpu_custom_call.1} parent=5 // pred_fallthru
        _
      %p127 = scmp.lt.s32.totalorder %s12, 2
      // Predicated region
      $region21: #{tpu_custom_call.1} parent=5 // pred_check
        %p128 = pneg %p127
      $region22: #{tpu_custom_call.1} parent=5 // pred_check_branch
        %130 = sbr.rel (%p128) target = $region24
      $region23: #{tpu_custom_call.1} parent=5 // pred_region
        // Predicated region
        $region25: #{tpu_custom_call.1} parent=23 // pred_check
          %p131 = pneg %p32
        $region26: #{tpu_custom_call.1} parent=23 // pred_check_branch
          %133 = sbr.rel (%p131) target = $region28
        $region27: #{tpu_custom_call.1} parent=23 // pred_region
          %p134 = scmp.lt.s32.totalorder %s12, 1
          %s135 = scalar_select %p134, %s12, 1
          %s136 = smul.addr %s135, 8
          %s137 = smul.addr %s136, 4
          %s138 = scalar_lea.vmem %s0, %s137
        $region28: #{tpu_custom_call.1} parent=23 // pred_fallthru
          _
      $region24: #{tpu_custom_call.1} parent=5 // pred_fallthru
        _
      %p139 = scmp.le.s32.totalorder 1, %s12
      %p140 = scmp.lt.s32.totalorder %s12, 3
      %p141 = pnand %p139, %p140
      %p142 = pneg %p141
      // Predicated region
      $region29: #{tpu_custom_call.1} parent=5 // pred_check
        _
      $region30: #{tpu_custom_call.1} parent=5 // pred_check_branch
        %144 = sbr.rel (%p141) target = $region32
      $region31: #{tpu_custom_call.1} parent=5 // pred_region
        %s145 = ssub.s32 %s12, 1
        %p146 = scmp.lt.s32.totalorder %s17, 1
        %s147 = scalar_select %p146, %s17, 1
        %s148 = smul.addr %s147, 8
        %s149 = smul.addr %s148, 4
        %s150 = scalar_lea.vmem %s0, %s149
        %p151 = pneg %p38
        %p152 = pneg %p35
        %p153 = pneg %p59
        %p154 = pneg %p56
        %p155 = pneg %p80
        %p156 = pneg %p77
        %p157 = pneg %p106
        %p158 = pneg %p103
        %s159 = sand.u32 %s93, 1
        %s160 = scalar_lea.sflag [#allocation3], %s159
        %s161 = sand.u32 %s93, 1
        %s162 = smul.addr %s161, 64
        %s163 = scalar_lea.vmem [#allocation2], %s162
        %p164 = scmp.lt.s32.totalorder %s17, 1
        %s165 = scalar_select %p164, %s17, 1
        %s166 = smul.addr %s165, 8
        %s167 = smul.addr %s166, 4
        %s168 = scalar_lea.vmem %s0, %s167
        %v170 = vld [vmem:[%s168] sm:$0xf]
        %v171 = vld [vmem:[%s168 + $0x4] sm:$0xf]
        %v172 = vld [vmem:[%s168 + $0x8] sm:$0xf]
        %v173 = vld [vmem:[%s168 + $0xc] sm:$0xf]
        %v174 = vld [vmem:[%s168 + $0x10] sm:$0xf]
        %v175 = vld [vmem:[%s168 + $0x14] sm:$0xf]
        %v176 = vld [vmem:[%s168 + $0x18] sm:$0xf]
        %v177 = vld [vmem:[%s168 + $0x1c] sm:$0xf]
        %v178 = vld [vmem:[%s1] sm:$0xf]
        %v179 = vld [vmem:[%s1 + $0x4] sm:$0xf]
        %v180 = vld [vmem:[%s1 + $0x8] sm:$0xf]
        %v181 = vld [vmem:[%s1 + $0xc] sm:$0xf]
        %v182 = vld [vmem:[%s1 + $0x10] sm:$0xf]
        %v183 = vld [vmem:[%s1 + $0x14] sm:$0xf]
        %v184 = vld [vmem:[%s1 + $0x18] sm:$0xf]
        %v185 = vld [vmem:[%s1 + $0x1c] sm:$0xf]
        %v186 = vld [vmem:[%s1 + $0x20] sm:$0xf]
        %v187 = vld [vmem:[%s1 + $0x24] sm:$0xf]
        %v188 = vld [vmem:[%s1 + $0x28] sm:$0xf]
        %v189 = vld [vmem:[%s1 + $0x2c] sm:$0xf]
        %v190 = vld [vmem:[%s1 + $0x30] sm:$0xf]
        %v191 = vld [vmem:[%s1 + $0x34] sm:$0xf]
        %v192 = vld [vmem:[%s1 + $0x38] sm:$0xf]
        %v193 = vld [vmem:[%s1 + $0x3c] sm:$0xf]
        %v194 = vld [vmem:[%s1 + $0x40] sm:$0xf]
        %v195 = vld [vmem:[%s1 + $0x44] sm:$0xf]
        %v196 = vld [vmem:[%s1 + $0x48] sm:$0xf]
        %v197 = vld [vmem:[%s1 + $0x4c] sm:$0xf]
        %v198 = vld [vmem:[%s1 + $0x50] sm:$0xf]
        %v199 = vld [vmem:[%s1 + $0x54] sm:$0xf]
        %v200 = vld [vmem:[%s1 + $0x58] sm:$0xf]
        %v201 = vld [vmem:[%s1 + $0x5c] sm:$0xf]
        %v202 = vld [vmem:[%s2] sm:$0xff]
        %v203 = vld [vmem:[%s2 + $0x8] sm:$0xff]
        %v204 = vld [vmem:[%s2 + $0x10] sm:$0xff]
        %v205 = vld [vmem:[%s2 + $0x18] sm:$0xff]
        %v206 = vld [vmem:[%s2 + $0x20] sm:$0xff]
        %v207 = vld [vmem:[%s2 + $0x28] sm:$0xff]
        %v208 = vld [vmem:[%s2 + $0x30] sm:$0xff]
        %v209 = vld [vmem:[%s2 + $0x38] sm:$0xff]
        %v210 = vld [vmem:[%s2 + $0x40] sm:$0xff]
        %v211 = vld [vmem:[%s2 + $0x48] sm:$0xff]
        %v212 = vld [vmem:[%s2 + $0x50] sm:$0xff]
        %v213 = vld [vmem:[%s2 + $0x58] sm:$0xff]
        %v214 = vld [vmem:[%s2 + $0x60] sm:$0xff]
        %v215 = vld [vmem:[%s2 + $0x68] sm:$0xff]
        %v216 = vld [vmem:[%s2 + $0x70] sm:$0xff]
        %v217 = vld [vmem:[%s2 + $0x78] sm:$0xff]
        %v218 = vld [vmem:[%s2 + $0x80] sm:$0xff]
        %v219 = vld [vmem:[%s2 + $0x88] sm:$0xff]
        %v220 = vld [vmem:[%s2 + $0x90] sm:$0xff]
        %v221 = vld [vmem:[%s2 + $0x98] sm:$0xff]
        %v222 = vld [vmem:[%s2 + $0xa0] sm:$0xff]
        %v223 = vld [vmem:[%s2 + $0xa8] sm:$0xff]
        %v224 = vld [vmem:[%s2 + $0xb0] sm:$0xff]
        %v225 = vld [vmem:[%s2 + $0xb8] sm:$0xff]
        %227 = vset.pattern.permute.xlu0 0
        %228 = vperm.xlu0 %227, %v202
        %v229 = vpop.permute.xlu0 %228
        %232 = vset.pattern.permute.xlu0 0
        %233 = vperm.xlu0 %232, %v203
        %v234 = vpop.permute.xlu0 %233
        %237 = vset.pattern.permute.xlu0 0
        %238 = vperm.xlu0 %237, %v204
        %v239 = vpop.permute.xlu0 %238
        %242 = vset.pattern.permute.xlu0 0
        %243 = vperm.xlu0 %242, %v205
        %v244 = vpop.permute.xlu0 %243
        %247 = vset.pattern.permute.xlu0 0
        %248 = vperm.xlu0 %247, %v206
        %v249 = vpop.permute.xlu0 %248
        %252 = vset.pattern.permute.xlu0 0
        %253 = vperm.xlu0 %252, %v207
        %v254 = vpop.permute.xlu0 %253
        %257 = vset.pattern.permute.xlu0 0
        %258 = vperm.xlu0 %257, %v208
        %v259 = vpop.permute.xlu0 %258
        %262 = vset.pattern.permute.xlu0 0
        %263 = vperm.xlu0 %262, %v209
        %v264 = vpop.permute.xlu0 %263
        %267 = vset.pattern.permute.xlu0 0
        %268 = vperm.xlu0 %267, %v210
        %v269 = vpop.permute.xlu0 %268
        %272 = vset.pattern.permute.xlu0 0
        %273 = vperm.xlu0 %272, %v211
        %v274 = vpop.permute.xlu0 %273
        %277 = vset.pattern.permute.xlu0 0
        %278 = vperm.xlu0 %277, %v212
        %v279 = vpop.permute.xlu0 %278
        %282 = vset.pattern.permute.xlu0 0
        %283 = vperm.xlu0 %282, %v213
        %v284 = vpop.permute.xlu0 %283
        %287 = vset.pattern.permute.xlu0 0
        %288 = vperm.xlu0 %287, %v214
        %v289 = vpop.permute.xlu0 %288
        %292 = vset.pattern.permute.xlu0 0
        %293 = vperm.xlu0 %292, %v215
        %v294 = vpop.permute.xlu0 %293
        %297 = vset.pattern.permute.xlu0 0
        %298 = vperm.xlu0 %297, %v216
        %v299 = vpop.permute.xlu0 %298
        %302 = vset.pattern.permute.xlu0 0
        %303 = vperm.xlu0 %302, %v217
        %v304 = vpop.permute.xlu0 %303
        %307 = vset.pattern.permute.xlu0 0
        %308 = vperm.xlu0 %307, %v218
        %v309 = vpop.permute.xlu0 %308
        %312 = vset.pattern.permute.xlu0 0
        %313 = vperm.xlu0 %312, %v219
        %v314 = vpop.permute.xlu0 %313
        %317 = vset.pattern.permute.xlu0 0
        %318 = vperm.xlu0 %317, %v220
        %v319 = vpop.permute.xlu0 %318
        %322 = vset.pattern.permute.xlu0 0
        %323 = vperm.xlu0 %322, %v221
        %v324 = vpop.permute.xlu0 %323
        %327 = vset.pattern.permute.xlu0 0
        %328 = vperm.xlu0 %327, %v222
        %v329 = vpop.permute.xlu0 %328
        %332 = vset.pattern.permute.xlu0 0
        %333 = vperm.xlu0 %332, %v223
        %v334 = vpop.permute.xlu0 %333
        %337 = vset.pattern.permute.xlu0 0
        %338 = vperm.xlu0 %337, %v224
        %v339 = vpop.permute.xlu0 %338
        %342 = vset.pattern.permute.xlu0 0
        %343 = vperm.xlu0 %342, %v225
        %v344 = vpop.permute.xlu0 %343
        %v370 = vunpack.c.l.b16 %v178
        %v371 = vunpack.c.l.b16 %v179
        %v372 = vunpack.c.l.b16 %v180
        %v373 = vunpack.c.l.b16 %v181
        %v374 = vunpack.c.l.b16 %v182
        %v375 = vunpack.c.l.b16 %v183
        %v376 = vunpack.c.l.b16 %v184
        %v377 = vunpack.c.l.b16 %v185
        %v378 = vunpack.c.l.b16 %v186
        %v379 = vunpack.c.l.b16 %v187
        %v380 = vunpack.c.l.b16 %v188
        %v381 = vunpack.c.l.b16 %v189
        %v382 = vunpack.c.l.b16 %v190
        %v383 = vunpack.c.l.b16 %v191
        %v384 = vunpack.c.l.b16 %v192
        %v385 = vunpack.c.l.b16 %v193
        %v386 = vunpack.c.l.b16 %v194
        %v387 = vunpack.c.l.b16 %v195
        %v388 = vunpack.c.l.b16 %v196
        %v389 = vunpack.c.l.b16 %v197
        %v390 = vunpack.c.l.b16 %v198
        %v391 = vunpack.c.l.b16 %v199
        %v392 = vunpack.c.l.b16 %v200
        %v393 = vunpack.c.l.b16 %v201
        %v394 = vpack.c.b16 %v371, %v370
        %v395 = vpack.c.b16 %v373, %v372
        %v396 = vpack.c.b16 %v375, %v374
        %v397 = vpack.c.b16 %v377, %v376
        %v398 = vpack.c.b16 %v379, %v378
        %v399 = vpack.c.b16 %v381, %v380
        %v400 = vpack.c.b16 %v383, %v382
        %v401 = vpack.c.b16 %v385, %v384
        %v402 = vpack.c.b16 %v387, %v386
        %v403 = vpack.c.b16 %v389, %v388
        %v404 = vpack.c.b16 %v391, %v390
        %v405 = vpack.c.b16 %v393, %v392
        %v414 = vunpack.c.l.b16 %v170
        %v415 = vunpack.c.l.b16 %v171
        %v416 = vunpack.c.l.b16 %v172
        %v417 = vunpack.c.l.b16 %v173
        %v418 = vunpack.c.l.b16 %v174
        %v419 = vunpack.c.l.b16 %v175
        %v420 = vunpack.c.l.b16 %v176
        %v421 = vunpack.c.l.b16 %v177
        %v422 = vpack.c.b16 %v415, %v414
        %v423 = vpack.c.b16 %v417, %v416
        %v424 = vpack.c.b16 %v419, %v418
        %v425 = vpack.c.b16 %v421, %v420
        %vm430 = vcmask 523264
        %v432 = vsel %vm430, %v394, 0
        %v435 = vsel %vm430, %v395, 0
        %v438 = vsel %vm430, %v396, 0
        %v441 = vsel %vm430, %v397, 0
        %v444 = vsel %vm430, %v398, 0
        %v447 = vsel %vm430, %v399, 0
        %v450 = vsel %vm430, %v400, 0
        %v453 = vsel %vm430, %v401, 0
        %v456 = vsel %vm430, %v402, 0
        %v459 = vsel %vm430, %v403, 0
        %v462 = vsel %vm430, %v404, 0
        %v465 = vsel %vm430, %v405, 0
        %467 = vmatprep.subr.bf16.mxu0 0
        %468 = vmatpush1.bf16.msra.mxu0 0
        %469 = vmatprep.subr.bf16.mxu0 0
        %470 = vmatpush1.bf16.msra.mxu0 0
        %471 = vmatprep.subr.bf16.mxu0 0
        %472 = vmatpush1.bf16.msra.mxu0 0
        %473 = vmatprep.subr.bf16.mxu0 0
        %474 = vmatpush1.bf16.msra.mxu0 0
        %475 = vmatprep.subr.bf16.mxu0 0
        %476 = vmatpush1.bf16.msra.mxu0 %v425
        %477 = vmatprep.subr.bf16.mxu0 0
        %478 = vmatpush1.bf16.msra.mxu0 %v424
        %479 = vmatprep.subr.bf16.mxu0 0
        %480 = vmatpush1.bf16.msra.mxu0 %v423
        %481 = vmatprep.subr.bf16.mxu0 0
        %482 = vmatpush1.bf16.msra.mxu0 %v422
        %483 = vmatprep.subr.bf16.mxu0 0
        %484 = vmatpush2.bf16.msra.mxu0 0
        %485 = vmatprep.subr.bf16.mxu0 0
        %486 = vmatpush2.bf16.msra.mxu0 0
        %487 = vmatprep.subr.bf16.mxu0 0
        %488 = vmatpush2.bf16.msra.mxu0 0
        %489 = vmatprep.subr.bf16.mxu0 0
        %490 = vmatpush2.bf16.msra.mxu0 0
        %491 = vmatprep.subr.bf16.mxu0 0
        %492 = vmatpush2.bf16.msra.mxu0 0
        %493 = vmatprep.subr.bf16.mxu0 0
        %494 = vmatpush2.bf16.msra.mxu0 0
        %495 = vmatprep.subr.bf16.mxu0 0
        %496 = vmatpush2.bf16.msra.mxu0 0
        %497 = vmatprep.subr.bf16.mxu0 0
        %498 = vmatpush2.bf16.msra.mxu0 0
        %499 = vmatprep.mubr.bf16.mxu0 0
        %500 = vmatmul.mubr.bf16.gmra.mxu0 %v432
        %v501 = vpop.f32.mrf.mxu0
        %v502 = vadd.f32 %v229, %v501
        %v503 = vpop.f32.mrf.mxu0
        %v504 = vpop.f32.mrf.mxu0
        %v505 = vadd.f32 %v234, %v504
        %v506 = vpop.f32.mrf.mxu0
        %507 = vmatprep.mubr.bf16.mxu0 0
        %508 = vmatmul.mubr.bf16.gmra.mxu0 %v435
        %v509 = vpop.f32.mrf.mxu0
        %v510 = vadd.f32 %v239, %v509
        %v511 = vpop.f32.mrf.mxu0
        %v512 = vpop.f32.mrf.mxu0
        %v513 = vadd.f32 %v244, %v512
        %v514 = vpop.f32.mrf.mxu0
        %515 = vmatprep.mubr.bf16.mxu0 0
        %516 = vmatmul.mubr.bf16.gmra.mxu0 %v438
        %v517 = vpop.f32.mrf.mxu0
        %v518 = vadd.f32 %v249, %v517
        %v519 = vpop.f32.mrf.mxu0
        %v520 = vpop.f32.mrf.mxu0
        %v521 = vadd.f32 %v254, %v520
        %v522 = vpop.f32.mrf.mxu0
        %523 = vmatprep.mubr.bf16.mxu0 0
        %524 = vmatmul.mubr.bf16.gmra.mxu0 %v441
        %v525 = vpop.f32.mrf.mxu0
        %v526 = vadd.f32 %v259, %v525
        %v527 = vpop.f32.mrf.mxu0
        %v528 = vpop.f32.mrf.mxu0
        %v529 = vadd.f32 %v264, %v528
        %v530 = vpop.f32.mrf.mxu0
        %531 = vmatprep.mubr.bf16.mxu0 0
        %532 = vmatmul.mubr.bf16.gmra.mxu0 %v444
        %v533 = vpop.f32.mrf.mxu0
        %v534 = vadd.f32 %v269, %v533
        %v535 = vpop.f32.mrf.mxu0
        %v536 = vpop.f32.mrf.mxu0
        %v537 = vadd.f32 %v274, %v536
        %v538 = vpop.f32.mrf.mxu0
        %539 = vmatprep.mubr.bf16.mxu0 0
        %540 = vmatmul.mubr.bf16.gmra.mxu0 %v447
        %v541 = vpop.f32.mrf.mxu0
        %v542 = vadd.f32 %v279, %v541
        %v543 = vpop.f32.mrf.mxu0
        %v544 = vpop.f32.mrf.mxu0
        %v545 = vadd.f32 %v284, %v544
        %v546 = vpop.f32.mrf.mxu0
        %547 = vmatprep.mubr.bf16.mxu0 0
        %548 = vmatmul.mubr.bf16.gmra.mxu0 %v450
        %v549 = vpop.f32.mrf.mxu0
        %v550 = vadd.f32 %v289, %v549
        %v551 = vpop.f32.mrf.mxu0
        %v552 = vpop.f32.mrf.mxu0
        %v553 = vadd.f32 %v294, %v552
        %v554 = vpop.f32.mrf.mxu0
        %555 = vmatprep.mubr.bf16.mxu0 0
        %556 = vmatmul.mubr.bf16.gmra.mxu0 %v453
        %v557 = vpop.f32.mrf.mxu0
        %v558 = vadd.f32 %v299, %v557
        %v559 = vpop.f32.mrf.mxu0
        %v560 = vpop.f32.mrf.mxu0
        %v561 = vadd.f32 %v304, %v560
        %v562 = vpop.f32.mrf.mxu0
        %563 = vmatprep.mubr.bf16.mxu0 0
        %564 = vmatmul.mubr.bf16.gmra.mxu0 %v456
        %v565 = vpop.f32.mrf.mxu0
        %v566 = vadd.f32 %v309, %v565
        %v567 = vpop.f32.mrf.mxu0
        %v568 = vpop.f32.mrf.mxu0
        %v569 = vadd.f32 %v314, %v568
        %v570 = vpop.f32.mrf.mxu0
        %571 = vmatprep.mubr.bf16.mxu0 0
        %572 = vmatmul.mubr.bf16.gmra.mxu0 %v459
        %v573 = vpop.f32.mrf.mxu0
        %v574 = vadd.f32 %v319, %v573
        %v575 = vpop.f32.mrf.mxu0
        %v576 = vpop.f32.mrf.mxu0
        %v577 = vadd.f32 %v324, %v576
        %v578 = vpop.f32.mrf.mxu0
        %579 = vmatprep.mubr.bf16.mxu0 0
        %580 = vmatmul.mubr.bf16.gmra.mxu0 %v462
        %v581 = vpop.f32.mrf.mxu0
        %v582 = vadd.f32 %v329, %v581
        %v583 = vpop.f32.mrf.mxu0
        %v584 = vpop.f32.mrf.mxu0
        %v585 = vadd.f32 %v334, %v584
        %v586 = vpop.f32.mrf.mxu0
        %587 = vmatprep.mubr.bf16.mxu0 0
        %588 = vmatmul.mubr.bf16.gmra.mxu0 %v465
        %v589 = vpop.f32.mrf.mxu0
        %v590 = vadd.f32 %v339, %v589
        %v591 = vpop.f32.mrf.mxu0
        %v592 = vpop.f32.mrf.mxu0
        %v593 = vadd.f32 %v344, %v592
        %v594 = vpop.f32.mrf.mxu0
        %595 = vdwg.mxu0
        %v596 = vmul.f32 %v502, 0.35355338
        %v597 = vmul.f32 %v505, 0.35355338
        %v598 = vmul.f32 %v510, 0.35355338
        %v599 = vmul.f32 %v513, 0.35355338
        %v600 = vmul.f32 %v518, 0.35355338
        %v601 = vmul.f32 %v521, 0.35355338
        %v602 = vmul.f32 %v526, 0.35355338
        %v603 = vmul.f32 %v529, 0.35355338
        %v604 = vpack.c.bf16 %v596, %v596
        %v605 = vpack.c.bf16 %v534, %v534
        %v606 = vpack.c.bf16 %v566, %v566
        %607 = vxpose.xlu0.c.b16.start [1/8] %v604, 128
        %608 = vxpose.xlu0.c.b16.cont [2/8] 0, 128
        %609 = vxpose.xlu0.c.b16.cont [3/8] 0, 128
        %610 = vxpose.xlu0.c.b16.cont [4/8] 0, 128
        %611 = vxpose.xlu0.c.b16.cont [5/8] 0, 128
        %612 = vxpose.xlu0.c.b16.cont [6/8] 0, 128
        %613 = vxpose.xlu0.c.b16.cont [7/8] 0, 128
        %614 = vxpose.xlu0.c.b16.end [8/8] 0, 128
        %v615 = vpop.trf.xlu0
        %v616 = vpop.trf.xlu0
        %v617 = vpop.trf.xlu0
        %v618 = vpop.trf.xlu0
        %v619 = vpop.trf.xlu0
        %v620 = vpop.trf.xlu0
        %v621 = vpop.trf.xlu0
        %v622 = vpop.trf.xlu0
        %vm623 = vcmask 64512
        %v625 = vsel %vm623, %v615, 0
        %v628 = vsel %vm623, %v616, 0
        %v631 = vsel %vm623, %v617, 0
        %v634 = vsel %vm623, %v618, 0
        %vm636 = vcmask 1043456
        %v638 = vsel %vm636, %v605, 0
        %640 = vmatprep.subr.bf16.mxu0 0
        %641 = vmatpush1.bf16.msra.mxu0 0
        %642 = vmatprep.subr.bf16.mxu0 0
        %643 = vmatpush1.bf16.msra.mxu0 0
        %644 = vmatprep.subr.bf16.mxu0 0
        %645 = vmatpush1.bf16.msra.mxu0 0
        %646 = vmatprep.subr.bf16.mxu0 0
        %647 = vmatpush1.bf16.msra.mxu0 0
        %648 = vmatprep.subr.bf16.mxu0 0
        %649 = vmatpush1.bf16.msra.mxu0 0
        %650 = vmatprep.subr.bf16.mxu0 0
        %651 = vmatpush1.bf16.msra.mxu0 0
        %652 = vmatprep.subr.bf16.mxu0 0
        %653 = vmatpush1.bf16.msra.mxu0 0
        %654 = vmatprep.subr.bf16.mxu0 0
        %655 = vmatpush1.bf16.msra.mxu0 %v638
        %656 = vmatprep.subr.bf16.mxu0 0
        %657 = vmatpush2.bf16.msra.mxu0 0
        %658 = vmatprep.subr.bf16.mxu0 0
        %659 = vmatpush2.bf16.msra.mxu0 0
        %660 = vmatprep.subr.bf16.mxu0 0
        %661 = vmatpush2.bf16.msra.mxu0 0
        %662 = vmatprep.subr.bf16.mxu0 0
        %663 = vmatpush2.bf16.msra.mxu0 0
        %664 = vmatprep.subr.bf16.mxu0 0
        %665 = vmatpush2.bf16.msra.mxu0 0
        %666 = vmatprep.subr.bf16.mxu0 0
        %667 = vmatpush2.bf16.msra.mxu0 0
        %668 = vmatprep.subr.bf16.mxu0 0
        %669 = vmatpush2.bf16.msra.mxu0 0
        %670 = vmatprep.subr.bf16.mxu0 0
        %671 = vmatpush2.bf16.msra.mxu0 0
        %672 = vmatprep.mubr.bf16.mxu0 0
        %673 = vmatmul.mubr.bf16.gmra.mxu0 %v625
        %v674 = vpop.f32.mrf.mxu0
        %v675 = vadd.f32 0.0, %v674
        %v676 = vpop.f32.mrf.mxu0
        %v677 = vpop.f32.mrf.mxu0
        %v678 = vadd.f32 0.0, %v677
        %v679 = vpop.f32.mrf.mxu0
        %680 = vmatprep.mubr.bf16.mxu0 0
        %681 = vmatmul.mubr.bf16.gmra.mxu0 %v628
        %v682 = vpop.f32.mrf.mxu0
        %v683 = vadd.f32 0.0, %v682
        %v684 = vpop.f32.mrf.mxu0
        %v685 = vpop.f32.mrf.mxu0
        %v686 = vadd.f32 0.0, %v685
        %v687 = vpop.f32.mrf.mxu0
        %688 = vmatprep.mubr.bf16.mxu0 0
        %689 = vmatmul.mubr.bf16.gmra.mxu0 %v631
        %v690 = vpop.f32.mrf.mxu0
        %v691 = vadd.f32 0.0, %v690
        %v692 = vpop.f32.mrf.mxu0
        %v693 = vpop.f32.mrf.mxu0
        %v694 = vadd.f32 0.0, %v693
        %v695 = vpop.f32.mrf.mxu0
        %696 = vmatprep.mubr.bf16.mxu0 0
        %697 = vmatmul.mubr.bf16.gmra.mxu0 %v634
        %v698 = vpop.f32.mrf.mxu0
        %v699 = vadd.f32 0.0, %v698
        %v700 = vpop.f32.mrf.mxu0
        %v701 = vpop.f32.mrf.mxu0
        %v702 = vadd.f32 0.0, %v701
        %v703 = vpop.f32.mrf.mxu0
        %704 = vdwg.mxu0
        %v705 = vsel %vm430, %v675, -inf
        %706 = vmax.xlane.f32.xlu0 %v705
        %v707 = vpop.xlane.xlu0 %706
        %v708 = vsel %vm430, %v678, -inf
        %709 = vmax.xlane.f32.xlu0 %v708
        %v710 = vpop.xlane.xlu0 %709
        %v711 = vsel %vm430, %v683, -inf
        %712 = vmax.xlane.f32.xlu0 %v711
        %v713 = vpop.xlane.xlu0 %712
        %v714 = vsel %vm430, %v686, -inf
        %715 = vmax.xlane.f32.xlu0 %v714
        %v716 = vpop.xlane.xlu0 %715
        %v717 = vsel %vm430, %v691, -inf
        %718 = vmax.xlane.f32.xlu0 %v717
        %v719 = vpop.xlane.xlu0 %718
        %v720 = vsel %vm430, %v694, -inf
        %721 = vmax.xlane.f32.xlu0 %v720
        %v722 = vpop.xlane.xlu0 %721
        %v723 = vsel %vm430, %v699, -inf
        %724 = vmax.xlane.f32.xlu0 %v723
        %v725 = vpop.xlane.xlu0 %724
        %v726 = vsel %vm430, %v702, -inf
        %727 = vmax.xlane.f32.xlu0 %v726
        %v728 = vpop.xlane.xlu0 %727
        %v729 = vsub.f32 %v675, %v707
        %v730 = vsub.f32 %v678, %v710
        %v731 = vsub.f32 %v683, %v713
        %v732 = vsub.f32 %v686, %v716
        %v733 = vsub.f32 %v691, %v719
        %v734 = vsub.f32 %v694, %v722
        %v735 = vsub.f32 %v699, %v725
        %v736 = vsub.f32 %v702, %v728
        %v737 = vmul.f32 %v729, 1.442695
        %v738 = vpow.pop %v737
        %v739 = vmul.f32 %v730, 1.442695
        %v740 = vpow.pop %v739
        %v741 = vmul.f32 %v731, 1.442695
        %v742 = vpow.pop %v741
        %v743 = vmul.f32 %v732, 1.442695
        %v744 = vpow.pop %v743
        %v745 = vmul.f32 %v733, 1.442695
        %v746 = vpow.pop %v745
        %v747 = vmul.f32 %v734, 1.442695
        %v748 = vpow.pop %v747
        %v749 = vmul.f32 %v735, 1.442695
        %v750 = vpow.pop %v749
        %v751 = vmul.f32 %v736, 1.442695
        %v752 = vpow.pop %v751
        %v753 = vsel %vm430, %v738, 0.0
        %754 = vadd.xlane.f32.xlu0 %v753
        %v755 = vpop.xlane.xlu0 %754
        %v756 = vsel %vm430, %v740, 0.0
        %757 = vadd.xlane.f32.xlu0 %v756
        %v758 = vpop.xlane.xlu0 %757
        %v759 = vsel %vm430, %v742, 0.0
        %760 = vadd.xlane.f32.xlu0 %v759
        %v761 = vpop.xlane.xlu0 %760
        %v762 = vsel %vm430, %v744, 0.0
        %763 = vadd.xlane.f32.xlu0 %v762
        %v764 = vpop.xlane.xlu0 %763
        %v765 = vsel %vm430, %v746, 0.0
        %766 = vadd.xlane.f32.xlu0 %v765
        %v767 = vpop.xlane.xlu0 %766
        %v768 = vsel %vm430, %v748, 0.0
        %769 = vadd.xlane.f32.xlu0 %v768
        %v770 = vpop.xlane.xlu0 %769
        %v771 = vsel %vm430, %v750, 0.0
        %772 = vadd.xlane.f32.xlu0 %v771
        %v773 = vpop.xlane.xlu0 %772
        %v774 = vsel %vm430, %v752, 0.0
        %775 = vadd.xlane.f32.xlu0 %v774
        %v776 = vpop.xlane.xlu0 %775
        %v777 = vrcp.pop %v755
        %v778 = vrcp.pop %v758
        %v779 = vrcp.pop %v761
        %v780 = vrcp.pop %v764
        %v781 = vrcp.pop %v767
        %v782 = vrcp.pop %v770
        %v783 = vrcp.pop %v773
        %v784 = vrcp.pop %v776
        %v785 = vmul.f32 %v738, %v777
        %v786 = vmul.f32 %v740, %v778
        %v787 = vmul.f32 %v742, %v779
        %v788 = vmul.f32 %v744, %v780
        %v789 = vmul.f32 %v746, %v781
        %v790 = vmul.f32 %v748, %v782
        %v791 = vmul.f32 %v750, %v783
        %v792 = vmul.f32 %v752, %v784
        %v793 = vpack.c.bf16 %v786, %v785
        %v794 = vpack.c.bf16 %v788, %v787
        %v795 = vpack.c.bf16 %v790, %v789
        %v796 = vpack.c.bf16 %v792, %v791
        %v798 = vsel %vm430, %v606, 0
        %v801 = vsel %vm430, %v793, 0
        %v804 = vsel %vm430, %v794, 0
        %v807 = vsel %vm430, %v795, 0
        %v810 = vsel %vm430, %v796, 0
        %812 = vmatprep.subr.bf16.mxu0 0
        %813 = vmatpush1.bf16.xpose.msra.mxu0 0
        %814 = vmatprep.subr.bf16.mxu0 0
        %815 = vmatpush1.bf16.xpose.msra.mxu0 0
        %816 = vmatprep.subr.bf16.mxu0 0
        %817 = vmatpush1.bf16.xpose.msra.mxu0 0
        %818 = vmatprep.subr.bf16.mxu0 0
        %819 = vmatpush1.bf16.xpose.msra.mxu0 0
        %820 = vmatprep.subr.bf16.mxu0 0
        %821 = vmatpush1.bf16.xpose.msra.mxu0 %v810
        %822 = vmatprep.subr.bf16.mxu0 0
        %823 = vmatpush1.bf16.xpose.msra.mxu0 %v807
        %824 = vmatprep.subr.bf16.mxu0 0
        %825 = vmatpush1.bf16.xpose.msra.mxu0 %v804
        %826 = vmatprep.subr.bf16.mxu0 0
        %827 = vmatpush1.bf16.xpose.msra.mxu0 %v801
        %828 = vmatprep.subr.bf16.mxu0 0
        %829 = vmatpush2.bf16.xpose.msra.mxu0 0
        %830 = vmatprep.subr.bf16.mxu0 0
        %831 = vmatpush2.bf16.xpose.msra.mxu0 0
        %832 = vmatprep.subr.bf16.mxu0 0
        %833 = vmatpush2.bf16.xpose.msra.mxu0 0
        %834 = vmatprep.subr.bf16.mxu0 0
        %835 = vmatpush2.bf16.xpose.msra.mxu0 0
        %836 = vmatprep.subr.bf16.mxu0 0
        %837 = vmatpush2.bf16.xpose.msra.mxu0 0
        %838 = vmatprep.subr.bf16.mxu0 0
        %839 = vmatpush2.bf16.xpose.msra.mxu0 0
        %840 = vmatprep.subr.bf16.mxu0 0
        %841 = vmatpush2.bf16.xpose.msra.mxu0 0
        %842 = vmatprep.subr.bf16.mxu0 0
        %843 = vmatpush2.bf16.xpose.msra.mxu0 0
        %844 = vmatprep.mubr.bf16.mxu0 0
        %845 = vmatmul.mubr.bf16.gmra.mxu0 %v798
        %v846 = vpop.f32.mrf.mxu0
        %v847 = vadd.f32 0.0, %v846
        %v848 = vpop.f32.mrf.mxu0
        %v849 = vpop.f32.mrf.mxu0
        %v850 = vpop.f32.mrf.mxu0
        %851 = vdwg.mxu0
        %852 = vst.msk [vmem:[%s163] sm:$0xff] %vm430, %v847
        %v853 = vpack.c.bf16 %v597, %v597
        %v854 = vpack.c.bf16 %v537, %v537
        %v855 = vpack.c.bf16 %v569, %v569
        %856 = vxpose.xlu0.c.b16.start [1/8] %v853, 128
        %857 = vxpose.xlu0.c.b16.cont [2/8] 0, 128
        %858 = vxpose.xlu0.c.b16.cont [3/8] 0, 128
        %859 = vxpose.xlu0.c.b16.cont [4/8] 0, 128
        %860 = vxpose.xlu0.c.b16.cont [5/8] 0, 128
        %861 = vxpose.xlu0.c.b16.cont [6/8] 0, 128
        %862 = vxpose.xlu0.c.b16.cont [7/8] 0, 128
        %863 = vxpose.xlu0.c.b16.end [8/8] 0, 128
        %v864 = vpop.trf.xlu0
        %v865 = vpop.trf.xlu0
        %v866 = vpop.trf.xlu0
        %v867 = vpop.trf.xlu0
        %v868 = vpop.trf.xlu0
        %v869 = vpop.trf.xlu0
        %v870 = vpop.trf.xlu0
        %v871 = vpop.trf.xlu0
        %v873 = vsel %vm623, %v864, 0
        %v876 = vsel %vm623, %v865, 0
        %v879 = vsel %vm623, %v866, 0
        %v882 = vsel %vm623, %v867, 0
        %v885 = vsel %vm636, %v854, 0
        %887 = vmatprep.subr.bf16.mxu0 0
        %888 = vmatpush1.bf16.msra.mxu0 0
        %889 = vmatprep.subr.bf16.mxu0 0
        %890 = vmatpush1.bf16.msra.mxu0 0
        %891 = vmatprep.subr.bf16.mxu0 0
        %892 = vmatpush1.bf16.msra.mxu0 0
        %893 = vmatprep.subr.bf16.mxu0 0
        %894 = vmatpush1.bf16.msra.mxu0 0
        %895 = vmatprep.subr.bf16.mxu0 0
        %896 = vmatpush1.bf16.msra.mxu0 0
        %897 = vmatprep.subr.bf16.mxu0 0
        %898 = vmatpush1.bf16.msra.mxu0 0
        %899 = vmatprep.subr.bf16.mxu0 0
        %900 = vmatpush1.bf16.msra.mxu0 0
        %901 = vmatprep.subr.bf16.mxu0 0
        %902 = vmatpush1.bf16.msra.mxu0 %v885
        %903 = vmatprep.subr.bf16.mxu0 0
        %904 = vmatpush2.bf16.msra.mxu0 0
        %905 = vmatprep.subr.bf16.mxu0 0
        %906 = vmatpush2.bf16.msra.mxu0 0
        %907 = vmatprep.subr.bf16.mxu0 0
        %908 = vmatpush2.bf16.msra.mxu0 0
        %909 = vmatprep.subr.bf16.mxu0 0
        %910 = vmatpush2.bf16.msra.mxu0 0
        %911 = vmatprep.subr.bf16.mxu0 0
        %912 = vmatpush2.bf16.msra.mxu0 0
        %913 = vmatprep.subr.bf16.mxu0 0
        %914 = vmatpush2.bf16.msra.mxu0 0
        %915 = vmatprep.subr.bf16.mxu0 0
        %916 = vmatpush2.bf16.msra.mxu0 0
        %917 = vmatprep.subr.bf16.mxu0 0
        %918 = vmatpush2.bf16.msra.mxu0 0
        %919 = vmatprep.mubr.bf16.mxu0 0
        %920 = vmatmul.mubr.bf16.gmra.mxu0 %v873
        %v921 = vpop.f32.mrf.mxu0
        %v922 = vadd.f32 0.0, %v921
        %v923 = vpop.f32.mrf.mxu0
        %v924 = vpop.f32.mrf.mxu0
        %v925 = vadd.f32 0.0, %v924
        %v926 = vpop.f32.mrf.mxu0
        %927 = vmatprep.mubr.bf16.mxu0 0
        %928 = vmatmul.mubr.bf16.gmra.mxu0 %v876
        %v929 = vpop.f32.mrf.mxu0
        %v930 = vadd.f32 0.0, %v929
        %v931 = vpop.f32.mrf.mxu0
        %v932 = vpop.f32.mrf.mxu0
        %v933 = vadd.f32 0.0, %v932
        %v934 = vpop.f32.mrf.mxu0
        %935 = vmatprep.mubr.bf16.mxu0 0
        %936 = vmatmul.mubr.bf16.gmra.mxu0 %v879
        %v937 = vpop.f32.mrf.mxu0
        %v938 = vadd.f32 0.0, %v937
        %v939 = vpop.f32.mrf.mxu0
        %v940 = vpop.f32.mrf.mxu0
        %v941 = vadd.f32 0.0, %v940
        %v942 = vpop.f32.mrf.mxu0
        %943 = vmatprep.mubr.bf16.mxu0 0
        %944 = vmatmul.mubr.bf16.gmra.mxu0 %v882
        %v945 = vpop.f32.mrf.mxu0
        %v946 = vadd.f32 0.0, %v945
        %v947 = vpop.f32.mrf.mxu0
        %v948 = vpop.f32.mrf.mxu0
        %v949 = vadd.f32 0.0, %v948
        %v950 = vpop.f32.mrf.mxu0
        %951 = vdwg.mxu0
        %v952 = vsel %vm430, %v922, -inf
        %953 = vmax.xlane.f32.xlu0 %v952
        %v954 = vpop.xlane.xlu0 %953
        %v955 = vsel %vm430, %v925, -inf
        %956 = vmax.xlane.f32.xlu0 %v955
        %v957 = vpop.xlane.xlu0 %956
        %v958 = vsel %vm430, %v930, -inf
        %959 = vmax.xlane.f32.xlu0 %v958
        %v960 = vpop.xlane.xlu0 %959
        %v961 = vsel %vm430, %v933, -inf
        %962 = vmax.xlane.f32.xlu0 %v961
        %v963 = vpop.xlane.xlu0 %962
        %v964 = vsel %vm430, %v938, -inf
        %965 = vmax.xlane.f32.xlu0 %v964
        %v966 = vpop.xlane.xlu0 %965
        %v967 = vsel %vm430, %v941, -inf
        %968 = vmax.xlane.f32.xlu0 %v967
        %v969 = vpop.xlane.xlu0 %968
        %v970 = vsel %vm430, %v946, -inf
        %971 = vmax.xlane.f32.xlu0 %v970
        %v972 = vpop.xlane.xlu0 %971
        %v973 = vsel %vm430, %v949, -inf
        %974 = vmax.xlane.f32.xlu0 %v973
        %v975 = vpop.xlane.xlu0 %974
        %v976 = vsub.f32 %v922, %v954
        %v977 = vsub.f32 %v925, %v957
        %v978 = vsub.f32 %v930, %v960
        %v979 = vsub.f32 %v933, %v963
        %v980 = vsub.f32 %v938, %v966
        %v981 = vsub.f32 %v941, %v969
        %v982 = vsub.f32 %v946, %v972
        %v983 = vsub.f32 %v949, %v975
        %v984 = vmul.f32 %v976, 1.442695
        %v985 = vpow.pop %v984
        %v986 = vmul.f32 %v977, 1.442695
        %v987 = vpow.pop %v986
        %v988 = vmul.f32 %v978, 1.442695
        %v989 = vpow.pop %v988
        %v990 = vmul.f32 %v979, 1.442695
        %v991 = vpow.pop %v990
        %v992 = vmul.f32 %v980, 1.442695
        %v993 = vpow.pop %v992
        %v994 = vmul.f32 %v981, 1.442695
        %v995 = vpow.pop %v994
        %v996 = vmul.f32 %v982, 1.442695
        %v997 = vpow.pop %v996
        %v998 = vmul.f32 %v983, 1.442695
        %v999 = vpow.pop %v998
        %v1000 = vsel %vm430, %v985, 0.0
        %1001 = vadd.xlane.f32.xlu0 %v1000
        %v1002 = vpop.xlane.xlu0 %1001
        %v1003 = vsel %vm430, %v987, 0.0
        %1004 = vadd.xlane.f32.xlu0 %v1003
        %v1005 = vpop.xlane.xlu0 %1004
        %v1006 = vsel %vm430, %v989, 0.0
        %1007 = vadd.xlane.f32.xlu0 %v1006
        %v1008 = vpop.xlane.xlu0 %1007
        %v1009 = vsel %vm430, %v991, 0.0
        %1010 = vadd.xlane.f32.xlu0 %v1009
        %v1011 = vpop.xlane.xlu0 %1010
        %v1012 = vsel %vm430, %v993, 0.0
        %1013 = vadd.xlane.f32.xlu0 %v1012
        %v1014 = vpop.xlane.xlu0 %1013
        %v1015 = vsel %vm430, %v995, 0.0
        %1016 = vadd.xlane.f32.xlu0 %v1015
        %v1017 = vpop.xlane.xlu0 %1016
        %v1018 = vsel %vm430, %v997, 0.0
        %1019 = vadd.xlane.f32.xlu0 %v1018
        %v1020 = vpop.xlane.xlu0 %1019
        %v1021 = vsel %vm430, %v999, 0.0
        %1022 = vadd.xlane.f32.xlu0 %v1021
        %v1023 = vpop.xlane.xlu0 %1022
        %v1024 = vrcp.pop %v1002
        %v1025 = vrcp.pop %v1005
        %v1026 = vrcp.pop %v1008
        %v1027 = vrcp.pop %v1011
        %v1028 = vrcp.pop %v1014
        %v1029 = vrcp.pop %v1017
        %v1030 = vrcp.pop %v1020
        %v1031 = vrcp.pop %v1023
        %v1032 = vmul.f32 %v985, %v1024
        %v1033 = vmul.f32 %v987, %v1025
        %v1034 = vmul.f32 %v989, %v1026
        %v1035 = vmul.f32 %v991, %v1027
        %v1036 = vmul.f32 %v993, %v1028
        %v1037 = vmul.f32 %v995, %v1029
        %v1038 = vmul.f32 %v997, %v1030
        %v1039 = vmul.f32 %v999, %v1031
        %v1040 = vpack.c.bf16 %v1033, %v1032
        %v1041 = vpack.c.bf16 %v1035, %v1034
        %v1042 = vpack.c.bf16 %v1037, %v1036
        %v1043 = vpack.c.bf16 %v1039, %v1038
        %v1045 = vsel %vm430, %v855, 0
        %v1048 = vsel %vm430, %v1040, 0
        %v1051 = vsel %vm430, %v1041, 0
        %v1054 = vsel %vm430, %v1042, 0
        %v1057 = vsel %vm430, %v1043, 0
        %1059 = vmatprep.subr.bf16.mxu0 0
        %1060 = vmatpush1.bf16.xpose.msra.mxu0 0
        %1061 = vmatprep.subr.bf16.mxu0 0
        %1062 = vmatpush1.bf16.xpose.msra.mxu0 0
        %1063 = vmatprep.subr.bf16.mxu0 0
        %1064 = vmatpush1.bf16.xpose.msra.mxu0 0
        %1065 = vmatprep.subr.bf16.mxu0 0
        %1066 = vmatpush1.bf16.xpose.msra.mxu0 0
        %1067 = vmatprep.subr.bf16.mxu0 0
        %1068 = vmatpush1.bf16.xpose.msra.mxu0 %v1057
        %1069 = vmatprep.subr.bf16.mxu0 0
        %1070 = vmatpush1.bf16.xpose.msra.mxu0 %v1054
        %1071 = vmatprep.subr.bf16.mxu0 0
        %1072 = vmatpush1.bf16.xpose.msra.mxu0 %v1051
        %1073 = vmatprep.subr.bf16.mxu0 0
        %1074 = vmatpush1.bf16.xpose.msra.mxu0 %v1048
        %1075 = vmatprep.subr.bf16.mxu0 0
        %1076 = vmatpush2.bf16.xpose.msra.mxu0 0
        %1077 = vmatprep.subr.bf16.mxu0 0
        %1078 = vmatpush2.bf16.xpose.msra.mxu0 0
        %1079 = vmatprep.subr.bf16.mxu0 0
        %1080 = vmatpush2.bf16.xpose.msra.mxu0 0
        %1081 = vmatprep.subr.bf16.mxu0 0
        %1082 = vmatpush2.bf16.xpose.msra.mxu0 0
        %1083 = vmatprep.subr.bf16.mxu0 0
        %1084 = vmatpush2.bf16.xpose.msra.mxu0 0
        %1085 = vmatprep.subr.bf16.mxu0 0
        %1086 = vmatpush2.bf16.xpose.msra.mxu0 0
        %1087 = vmatprep.subr.bf16.mxu0 0
        %1088 = vmatpush2.bf16.xpose.msra.mxu0 0
        %1089 = vmatprep.subr.bf16.mxu0 0
        %1090 = vmatpush2.bf16.xpose.msra.mxu0 0
        %1091 = vmatprep.mubr.bf16.mxu0 0
        %1092 = vmatmul.mubr.bf16.gmra.mxu0 %v1045
        %v1093 = vpop.f32.mrf.mxu0
        %v1094 = vadd.f32 0.0, %v1093
        %v1095 = vpop.f32.mrf.mxu0
        %v1096 = vpop.f32.mrf.mxu0
        %v1097 = vpop.f32.mrf.mxu0
        %1098 = vdwg.mxu0
        %1099 = vst.msk [vmem:[%s163 + $0x8] sm:$0xff] %vm430, %v1094
        %v1100 = vpack.c.bf16 %v598, %v598
        %v1101 = vpack.c.bf16 %v542, %v542
        %v1102 = vpack.c.bf16 %v574, %v574
        %1103 = vxpose.xlu0.c.b16.start [1/8] %v1100, 128
        %1104 = vxpose.xlu0.c.b16.cont [2/8] 0, 128
        %1105 = vxpose.xlu0.c.b16.cont [3/8] 0, 128
        %1106 = vxpose.xlu0.c.b16.cont [4/8] 0, 128
        %1107 = vxpose.xlu0.c.b16.cont [5/8] 0, 128
        %1108 = vxpose.xlu0.c.b16.cont [6/8] 0, 128
        %1109 = vxpose.xlu0.c.b16.cont [7/8] 0, 128
        %1110 = vxpose.xlu0.c.b16.end [8/8] 0, 128
        %v1111 = vpop.trf.xlu0
        %v1112 = vpop.trf.xlu0
        %v1113 = vpop.trf.xlu0
        %v1114 = vpop.trf.xlu0
        %v1115 = vpop.trf.xlu0
        %v1116 = vpop.trf.xlu0
        %v1117 = vpop.trf.xlu0
        %v1118 = vpop.trf.xlu0
        %v1120 = vsel %vm623, %v1111, 0
        %v1123 = vsel %vm623, %v1112, 0
        %v1126 = vsel %vm623, %v1113, 0
        %v1129 = vsel %vm623, %v1114, 0
        %v1132 = vsel %vm636, %v1101, 0
        %1134 = vmatprep.subr.bf16.mxu0 0
        %1135 = vmatpush1.bf16.msra.mxu0 0
        %1136 = vmatprep.subr.bf16.mxu0 0
        %1137 = vmatpush1.bf16.msra.mxu0 0
        %1138 = vmatprep.subr.bf16.mxu0 0
        %1139 = vmatpush1.bf16.msra.mxu0 0
        %1140 = vmatprep.subr.bf16.mxu0 0
        %1141 = vmatpush1.bf16.msra.mxu0 0
        %1142 = vmatprep.subr.bf16.mxu0 0
        %1143 = vmatpush1.bf16.msra.mxu0 0
        %1144 = vmatprep.subr.bf16.mxu0 0
        %1145 = vmatpush1.bf16.msra.mxu0 0
        %1146 = vmatprep.subr.bf16.mxu0 0
        %1147 = vmatpush1.bf16.msra.mxu0 0
        %1148 = vmatprep.subr.bf16.mxu0 0
        %1149 = vmatpush1.bf16.msra.mxu0 %v1132
        %1150 = vmatprep.subr.bf16.mxu0 0
        %1151 = vmatpush2.bf16.msra.mxu0 0
        %1152 = vmatprep.subr.bf16.mxu0 0
        %1153 = vmatpush2.bf16.msra.mxu0 0
        %1154 = vmatprep.subr.bf16.mxu0 0
        %1155 = vmatpush2.bf16.msra.mxu0 0
        %1156 = vmatprep.subr.bf16.mxu0 0
        %1157 = vmatpush2.bf16.msra.mxu0 0
        %1158 = vmatprep.subr.bf16.mxu0 0
        %1159 = vmatpush2.bf16.msra.mxu0 0
        %1160 = vmatprep.subr.bf16.mxu0 0
        %1161 = vmatpush2.bf16.msra.mxu0 0
        %1162 = vmatprep.subr.bf16.mxu0 0
        %1163 = vmatpush2.bf16.msra.mxu0 0
        %1164 = vmatprep.subr.bf16.mxu0 0
        %1165 = vmatpush2.bf16.msra.mxu0 0
        %1166 = vmatprep.mubr.bf16.mxu0 0
        %1167 = vmatmul.mubr.bf16.gmra.mxu0 %v1120
        %v1168 = vpop.f32.mrf.mxu0
        %v1169 = vadd.f32 0.0, %v1168
        %v1170 = vpop.f32.mrf.mxu0
        %v1171 = vpop.f32.mrf.mxu0
        %v1172 = vadd.f32 0.0, %v1171
        %v1173 = vpop.f32.mrf.mxu0
        %1174 = vmatprep.mubr.bf16.mxu0 0
        %1175 = vmatmul.mubr.bf16.gmra.mxu0 %v1123
        %v1176 = vpop.f32.mrf.mxu0
        %v1177 = vadd.f32 0.0, %v1176
        %v1178 = vpop.f32.mrf.mxu0
        %v1179 = vpop.f32.mrf.mxu0
        %v1180 = vadd.f32 0.0, %v1179
        %v1181 = vpop.f32.mrf.mxu0
        %1182 = vmatprep.mubr.bf16.mxu0 0
        %1183 = vmatmul.mubr.bf16.gmra.mxu0 %v1126
        %v1184 = vpop.f32.mrf.mxu0
        %v1185 = vadd.f32 0.0, %v1184
        %v1186 = vpop.f32.mrf.mxu0
        %v1187 = vpop.f32.mrf.mxu0
        %v1188 = vadd.f32 0.0, %v1187
        %v1189 = vpop.f32.mrf.mxu0
        %1190 = vmatprep.mubr.bf16.mxu0 0
        %1191 = vmatmul.mubr.bf16.gmra.mxu0 %v1129
        %v1192 = vpop.f32.mrf.mxu0
        %v1193 = vadd.f32 0.0, %v1192
        %v1194 = vpop.f32.mrf.mxu0
        %v1195 = vpop.f32.mrf.mxu0
        %v1196 = vadd.f32 0.0, %v1195
        %v1197 = vpop.f32.mrf.mxu0
        %1198 = vdwg.mxu0
        %v1199 = vsel %vm430, %v1169, -inf
        %1200 = vmax.xlane.f32.xlu0 %v1199
        %v1201 = vpop.xlane.xlu0 %1200
        %v1202 = vsel %vm430, %v1172, -inf
        %1203 = vmax.xlane.f32.xlu0 %v1202
        %v1204 = vpop.xlane.xlu0 %1203
        %v1205 = vsel %vm430, %v1177, -inf
        %1206 = vmax.xlane.f32.xlu0 %v1205
        %v1207 = vpop.xlane.xlu0 %1206
        %v1208 = vsel %vm430, %v1180, -inf
        %1209 = vmax.xlane.f32.xlu0 %v1208
        %v1210 = vpop.xlane.xlu0 %1209
        %v1211 = vsel %vm430, %v1185, -inf
        %1212 = vmax.xlane.f32.xlu0 %v1211
        %v1213 = vpop.xlane.xlu0 %1212
        %v1214 = vsel %vm430, %v1188, -inf
        %1215 = vmax.xlane.f32.xlu0 %v1214
        %v1216 = vpop.xlane.xlu0 %1215
        %v1217 = vsel %vm430, %v1193, -inf
        %1218 = vmax.xlane.f32.xlu0 %v1217
        %v1219 = vpop.xlane.xlu0 %1218
        %v1220 = vsel %vm430, %v1196, -inf
        %1221 = vmax.xlane.f32.xlu0 %v1220
        %v1222 = vpop.xlane.xlu0 %1221
        %v1223 = vsub.f32 %v1169, %v1201
        %v1224 = vsub.f32 %v1172, %v1204
        %v1225 = vsub.f32 %v1177, %v1207
        %v1226 = vsub.f32 %v1180, %v1210
        %v1227 = vsub.f32 %v1185, %v1213
        %v1228 = vsub.f32 %v1188, %v1216
        %v1229 = vsub.f32 %v1193, %v1219
        %v1230 = vsub.f32 %v1196, %v1222
        %v1231 = vmul.f32 %v1223, 1.442695
        %v1232 = vpow.pop %v1231
        %v1233 = vmul.f32 %v1224, 1.442695
        %v1234 = vpow.pop %v1233
        %v1235 = vmul.f32 %v1225, 1.442695
        %v1236 = vpow.pop %v1235
        %v1237 = vmul.f32 %v1226, 1.442695
        %v1238 = vpow.pop %v1237
        %v1239 = vmul.f32 %v1227, 1.442695
        %v1240 = vpow.pop %v1239
        %v1241 = vmul.f32 %v1228, 1.442695
        %v1242 = vpow.pop %v1241
        %v1243 = vmul.f32 %v1229, 1.442695
        %v1244 = vpow.pop %v1243
        %v1245 = vmul.f32 %v1230, 1.442695
        %v1246 = vpow.pop %v1245
        %v1247 = vsel %vm430, %v1232, 0.0
        %1248 = vadd.xlane.f32.xlu0 %v1247
        %v1249 = vpop.xlane.xlu0 %1248
        %v1250 = vsel %vm430, %v1234, 0.0
        %1251 = vadd.xlane.f32.xlu0 %v1250
        %v1252 = vpop.xlane.xlu0 %1251
        %v1253 = vsel %vm430, %v1236, 0.0
        %1254 = vadd.xlane.f32.xlu0 %v1253
        %v1255 = vpop.xlane.xlu0 %1254
        %v1256 = vsel %vm430, %v1238, 0.0
        %1257 = vadd.xlane.f32.xlu0 %v1256
        %v1258 = vpop.xlane.xlu0 %1257
        %v1259 = vsel %vm430, %v1240, 0.0
        %1260 = vadd.xlane.f32.xlu0 %v1259
        %v1261 = vpop.xlane.xlu0 %1260
        %v1262 = vsel %vm430, %v1242, 0.0
        %1263 = vadd.xlane.f32.xlu0 %v1262
        %v1264 = vpop.xlane.xlu0 %1263
        %v1265 = vsel %vm430, %v1244, 0.0
        %1266 = vadd.xlane.f32.xlu0 %v1265
        %v1267 = vpop.xlane.xlu0 %1266
        %v1268 = vsel %vm430, %v1246, 0.0
        %1269 = vadd.xlane.f32.xlu0 %v1268
        %v1270 = vpop.xlane.xlu0 %1269
        %v1271 = vrcp.pop %v1249
        %v1272 = vrcp.pop %v1252
        %v1273 = vrcp.pop %v1255
        %v1274 = vrcp.pop %v1258
        %v1275 = vrcp.pop %v1261
        %v1276 = vrcp.pop %v1264
        %v1277 = vrcp.pop %v1267
        %v1278 = vrcp.pop %v1270
        %v1279 = vmul.f32 %v1232, %v1271
        %v1280 = vmul.f32 %v1234, %v1272
        %v1281 = vmul.f32 %v1236, %v1273
        %v1282 = vmul.f32 %v1238, %v1274
        %v1283 = vmul.f32 %v1240, %v1275
        %v1284 = vmul.f32 %v1242, %v1276
        %v1285 = vmul.f32 %v1244, %v1277
        %v1286 = vmul.f32 %v1246, %v1278
        %v1287 = vpack.c.bf16 %v1280, %v1279
        %v1288 = vpack.c.bf16 %v1282, %v1281
        %v1289 = vpack.c.bf16 %v1284, %v1283
        %v1290 = vpack.c.bf16 %v1286, %v1285
        %v1292 = vsel %vm430, %v1102, 0
        %v1295 = vsel %vm430, %v1287, 0
        %v1298 = vsel %vm430, %v1288, 0
        %v1301 = vsel %vm430, %v1289, 0
        %v1304 = vsel %vm430, %v1290, 0
        %1306 = vmatprep.subr.bf16.mxu0 0
        %1307 = vmatpush1.bf16.xpose.msra.mxu0 0
        %1308 = vmatprep.subr.bf16.mxu0 0
        %1309 = vmatpush1.bf16.xpose.msra.mxu0 0
        %1310 = vmatprep.subr.bf16.mxu0 0
        %1311 = vmatpush1.bf16.xpose.msra.mxu0 0
        %1312 = vmatprep.subr.bf16.mxu0 0
        %1313 = vmatpush1.bf16.xpose.msra.mxu0 0
        %1314 = vmatprep.subr.bf16.mxu0 0
        %1315 = vmatpush1.bf16.xpose.msra.mxu0 %v1304
        %1316 = vmatprep.subr.bf16.mxu0 0
        %1317 = vmatpush1.bf16.xpose.msra.mxu0 %v1301
        %1318 = vmatprep.subr.bf16.mxu0 0
        %1319 = vmatpush1.bf16.xpose.msra.mxu0 %v1298
        %1320 = vmatprep.subr.bf16.mxu0 0
        %1321 = vmatpush1.bf16.xpose.msra.mxu0 %v1295
        %1322 = vmatprep.subr.bf16.mxu0 0
        %1323 = vmatpush2.bf16.xpose.msra.mxu0 0
        %1324 = vmatprep.subr.bf16.mxu0 0
        %1325 = vmatpush2.bf16.xpose.msra.mxu0 0
        %1326 = vmatprep.subr.bf16.mxu0 0
        %1327 = vmatpush2.bf16.xpose.msra.mxu0 0
        %1328 = vmatprep.subr.bf16.mxu0 0
        %1329 = vmatpush2.bf16.xpose.msra.mxu0 0
        %1330 = vmatprep.subr.bf16.mxu0 0
        %1331 = vmatpush2.bf16.xpose.msra.mxu0 0
        %1332 = vmatprep.subr.bf16.mxu0 0
        %1333 = vmatpush2.bf16.xpose.msra.mxu0 0
        %1334 = vmatprep.subr.bf16.mxu0 0
        %1335 = vmatpush2.bf16.xpose.msra.mxu0 0
        %1336 = vmatprep.subr.bf16.mxu0 0
        %1337 = vmatpush2.bf16.xpose.msra.mxu0 0
        %1338 = vmatprep.mubr.bf16.mxu0 0
        %1339 = vmatmul.mubr.bf16.gmra.mxu0 %v1292
        %v1340 = vpop.f32.mrf.mxu0
        %v1341 = vadd.f32 0.0, %v1340
        %v1342 = vpop.f32.mrf.mxu0
        %v1343 = vpop.f32.mrf.mxu0
        %v1344 = vpop.f32.mrf.mxu0
        %1345 = vdwg.mxu0
        %1346 = vst.msk [vmem:[%s163 + $0x10] sm:$0xff] %vm430, %v1341
        %v1347 = vpack.c.bf16 %v599, %v599
        %v1348 = vpack.c.bf16 %v545, %v545
        %v1349 = vpack.c.bf16 %v577, %v577
        %1350 = vxpose.xlu0.c.b16.start [1/8] %v1347, 128
        %1351 = vxpose.xlu0.c.b16.cont [2/8] 0, 128
        %1352 = vxpose.xlu0.c.b16.cont [3/8] 0, 128
        %1353 = vxpose.xlu0.c.b16.cont [4/8] 0, 128
        %1354 = vxpose.xlu0.c.b16.cont [5/8] 0, 128
        %1355 = vxpose.xlu0.c.b16.cont [6/8] 0, 128
        %1356 = vxpose.xlu0.c.b16.cont [7/8] 0, 128
        %1357 = vxpose.xlu0.c.b16.end [8/8] 0, 128
        %v1358 = vpop.trf.xlu0
        %v1359 = vpop.trf.xlu0
        %v1360 = vpop.trf.xlu0
        %v1361 = vpop.trf.xlu0
        %v1362 = vpop.trf.xlu0
        %v1363 = vpop.trf.xlu0
        %v1364 = vpop.trf.xlu0
        %v1365 = vpop.trf.xlu0
        %v1367 = vsel %vm623, %v1358, 0
        %v1370 = vsel %vm623, %v1359, 0
        %v1373 = vsel %vm623, %v1360, 0
        %v1376 = vsel %vm623, %v1361, 0
        %v1379 = vsel %vm636, %v1348, 0
        %1381 = vmatprep.subr.bf16.mxu0 0
        %1382 = vmatpush1.bf16.msra.mxu0 0
        %1383 = vmatprep.subr.bf16.mxu0 0
        %1384 = vmatpush1.bf16.msra.mxu0 0
        %1385 = vmatprep.subr.bf16.mxu0 0
        %1386 = vmatpush1.bf16.msra.mxu0 0
        %1387 = vmatprep.subr.bf16.mxu0 0
        %1388 = vmatpush1.bf16.msra.mxu0 0
        %1389 = vmatprep.subr.bf16.mxu0 0
        %1390 = vmatpush1.bf16.msra.mxu0 0
        %1391 = vmatprep.subr.bf16.mxu0 0
        %1392 = vmatpush1.bf16.msra.mxu0 0
        %1393 = vmatprep.subr.bf16.mxu0 0
        %1394 = vmatpush1.bf16.msra.mxu0 0
        %1395 = vmatprep.subr.bf16.mxu0 0
        %1396 = vmatpush1.bf16.msra.mxu0 %v1379
        %1397 = vmatprep.subr.bf16.mxu0 0
        %1398 = vmatpush2.bf16.msra.mxu0 0
        %1399 = vmatprep.subr.bf16.mxu0 0
        %1400 = vmatpush2.bf16.msra.mxu0 0
        %1401 = vmatprep.subr.bf16.mxu0 0
        %1402 = vmatpush2.bf16.msra.mxu0 0
        %1403 = vmatprep.subr.bf16.mxu0 0
        %1404 = vmatpush2.bf16.msra.mxu0 0
        %1405 = vmatprep.subr.bf16.mxu0 0
        %1406 = vmatpush2.bf16.msra.mxu0 0
        %1407 = vmatprep.subr.bf16.mxu0 0
        %1408 = vmatpush2.bf16.msra.mxu0 0
        %1409 = vmatprep.subr.bf16.mxu0 0
        %1410 = vmatpush2.bf16.msra.mxu0 0
        %1411 = vmatprep.subr.bf16.mxu0 0
        %1412 = vmatpush2.bf16.msra.mxu0 0
        %1413 = vmatprep.mubr.bf16.mxu0 0
        %1414 = vmatmul.mubr.bf16.gmra.mxu0 %v1367
        %v1415 = vpop.f32.mrf.mxu0
        %v1416 = vadd.f32 0.0, %v1415
        %v1417 = vpop.f32.mrf.mxu0
        %v1418 = vpop.f32.mrf.mxu0
        %v1419 = vadd.f32 0.0, %v1418
        %v1420 = vpop.f32.mrf.mxu0
        %1421 = vmatprep.mubr.bf16.mxu0 0
        %1422 = vmatmul.mubr.bf16.gmra.mxu0 %v1370
        %v1423 = vpop.f32.mrf.mxu0
        %v1424 = vadd.f32 0.0, %v1423
        %v1425 = vpop.f32.mrf.mxu0
        %v1426 = vpop.f32.mrf.mxu0
        %v1427 = vadd.f32 0.0, %v1426
        %v1428 = vpop.f32.mrf.mxu0
        %1429 = vmatprep.mubr.bf16.mxu0 0
        %1430 = vmatmul.mubr.bf16.gmra.mxu0 %v1373
        %v1431 = vpop.f32.mrf.mxu0
        %v1432 = vadd.f32 0.0, %v1431
        %v1433 = vpop.f32.mrf.mxu0
        %v1434 = vpop.f32.mrf.mxu0
        %v1435 = vadd.f32 0.0, %v1434
        %v1436 = vpop.f32.mrf.mxu0
        %1437 = vmatprep.mubr.bf16.mxu0 0
        %1438 = vmatmul.mubr.bf16.gmra.mxu0 %v1376
        %v1439 = vpop.f32.mrf.mxu0
        %v1440 = vadd.f32 0.0, %v1439
        %v1441 = vpop.f32.mrf.mxu0
        %v1442 = vpop.f32.mrf.mxu0
        %v1443 = vadd.f32 0.0, %v1442
        %v1444 = vpop.f32.mrf.mxu0
        %1445 = vdwg.mxu0
        %v1446 = vsel %vm430, %v1416, -inf
        %1447 = vmax.xlane.f32.xlu0 %v1446
        %v1448 = vpop.xlane.xlu0 %1447
        %v1449 = vsel %vm430, %v1419, -inf
        %1450 = vmax.xlane.f32.xlu0 %v1449
        %v1451 = vpop.xlane.xlu0 %1450
        %v1452 = vsel %vm430, %v1424, -inf
        %1453 = vmax.xlane.f32.xlu0 %v1452
        %v1454 = vpop.xlane.xlu0 %1453
        %v1455 = vsel %vm430, %v1427, -inf
        %1456 = vmax.xlane.f32.xlu0 %v1455
        %v1457 = vpop.xlane.xlu0 %1456
        %v1458 = vsel %vm430, %v1432, -inf
        %1459 = vmax.xlane.f32.xlu0 %v1458
        %v1460 = vpop.xlane.xlu0 %1459
        %v1461 = vsel %vm430, %v1435, -inf
        %1462 = vmax.xlane.f32.xlu0 %v1461
        %v1463 = vpop.xlane.xlu0 %1462
        %v1464 = vsel %vm430, %v1440, -inf
        %1465 = vmax.xlane.f32.xlu0 %v1464
        %v1466 = vpop.xlane.xlu0 %1465
        %v1467 = vsel %vm430, %v1443, -inf
        %1468 = vmax.xlane.f32.xlu0 %v1467
        %v1469 = vpop.xlane.xlu0 %1468
        %v1470 = vsub.f32 %v1416, %v1448
        %v1471 = vsub.f32 %v1419, %v1451
        %v1472 = vsub.f32 %v1424, %v1454
        %v1473 = vsub.f32 %v1427, %v1457
        %v1474 = vsub.f32 %v1432, %v1460
        %v1475 = vsub.f32 %v1435, %v1463
        %v1476 = vsub.f32 %v1440, %v1466
        %v1477 = vsub.f32 %v1443, %v1469
        %v1478 = vmul.f32 %v1470, 1.442695
        %v1479 = vpow.pop %v1478
        %v1480 = vmul.f32 %v1471, 1.442695
        %v1481 = vpow.pop %v1480
        %v1482 = vmul.f32 %v1472, 1.442695
        %v1483 = vpow.pop %v1482
        %v1484 = vmul.f32 %v1473, 1.442695
        %v1485 = vpow.pop %v1484
        %v1486 = vmul.f32 %v1474, 1.442695
        %v1487 = vpow.pop %v1486
        %v1488 = vmul.f32 %v1475, 1.442695
        %v1489 = vpow.pop %v1488
        %v1490 = vmul.f32 %v1476, 1.442695
        %v1491 = vpow.pop %v1490
        %v1492 = vmul.f32 %v1477, 1.442695
        %v1493 = vpow.pop %v1492
        %v1494 = vsel %vm430, %v1479, 0.0
        %1495 = vadd.xlane.f32.xlu0 %v1494
        %v1496 = vpop.xlane.xlu0 %1495
        %v1497 = vsel %vm430, %v1481, 0.0
        %1498 = vadd.xlane.f32.xlu0 %v1497
        %v1499 = vpop.xlane.xlu0 %1498
        %v1500 = vsel %vm430, %v1483, 0.0
        %1501 = vadd.xlane.f32.xlu0 %v1500
        %v1502 = vpop.xlane.xlu0 %1501
        %v1503 = vsel %vm430, %v1485, 0.0
        %1504 = vadd.xlane.f32.xlu0 %v1503
        %v1505 = vpop.xlane.xlu0 %1504
        %v1506 = vsel %vm430, %v1487, 0.0
        %1507 = vadd.xlane.f32.xlu0 %v1506
        %v1508 = vpop.xlane.xlu0 %1507
        %v1509 = vsel %vm430, %v1489, 0.0
        %1510 = vadd.xlane.f32.xlu0 %v1509
        %v1511 = vpop.xlane.xlu0 %1510
        %v1512 = vsel %vm430, %v1491, 0.0
        %1513 = vadd.xlane.f32.xlu0 %v1512
        %v1514 = vpop.xlane.xlu0 %1513
        %v1515 = vsel %vm430, %v1493, 0.0
        %1516 = vadd.xlane.f32.xlu0 %v1515
        %v1517 = vpop.xlane.xlu0 %1516
        %v1518 = vrcp.pop %v1496
        %v1519 = vrcp.pop %v1499
        %v1520 = vrcp.pop %v1502
        %v1521 = vrcp.pop %v1505
        %v1522 = vrcp.pop %v1508
        %v1523 = vrcp.pop %v1511
        %v1524 = vrcp.pop %v1514
        %v1525 = vrcp.pop %v1517
        %v1526 = vmul.f32 %v1479, %v1518
        %v1527 = vmul.f32 %v1481, %v1519
        %v1528 = vmul.f32 %v1483, %v1520
        %v1529 = vmul.f32 %v1485, %v1521
        %v1530 = vmul.f32 %v1487, %v1522
        %v1531 = vmul.f32 %v1489, %v1523
        %v1532 = vmul.f32 %v1491, %v1524
        %v1533 = vmul.f32 %v1493, %v1525
        %v1534 = vpack.c.bf16 %v1527, %v1526
        %v1535 = vpack.c.bf16 %v1529, %v1528
        %v1536 = vpack.c.bf16 %v1531, %v1530
        %v1537 = vpack.c.bf16 %v1533, %v1532
        %v1539 = vsel %vm430, %v1349, 0
        %v1542 = vsel %vm430, %v1534, 0
        %v1545 = vsel %vm430, %v1535, 0
        %v1548 = vsel %vm430, %v1536, 0
        %v1551 = vsel %vm430, %v1537, 0
        %1553 = vmatprep.subr.bf16.mxu0 0
        %1554 = vmatpush1.bf16.xpose.msra.mxu0 0
        %1555 = vmatprep.subr.bf16.mxu0 0
        %1556 = vmatpush1.bf16.xpose.msra.mxu0 0
        %1557 = vmatprep.subr.bf16.mxu0 0
        %1558 = vmatpush1.bf16.xpose.msra.mxu0 0
        %1559 = vmatprep.subr.bf16.mxu0 0
        %1560 = vmatpush1.bf16.xpose.msra.mxu0 0
        %1561 = vmatprep.subr.bf16.mxu0 0
        %1562 = vmatpush1.bf16.xpose.msra.mxu0 %v1551
        %1563 = vmatprep.subr.bf16.mxu0 0
        %1564 = vmatpush1.bf16.xpose.msra.mxu0 %v1548
        %1565 = vmatprep.subr.bf16.mxu0 0
        %1566 = vmatpush1.bf16.xpose.msra.mxu0 %v1545
        %1567 = vmatprep.subr.bf16.mxu0 0
        %1568 = vmatpush1.bf16.xpose.msra.mxu0 %v1542
        %1569 = vmatprep.subr.bf16.mxu0 0
        %1570 = vmatpush2.bf16.xpose.msra.mxu0 0
        %1571 = vmatprep.subr.bf16.mxu0 0
        %1572 = vmatpush2.bf16.xpose.msra.mxu0 0
        %1573 = vmatprep.subr.bf16.mxu0 0
        %1574 = vmatpush2.bf16.xpose.msra.mxu0 0
        %1575 = vmatprep.subr.bf16.mxu0 0
        %1576 = vmatpush2.bf16.xpose.msra.mxu0 0
        %1577 = vmatprep.subr.bf16.mxu0 0
        %1578 = vmatpush2.bf16.xpose.msra.mxu0 0
        %1579 = vmatprep.subr.bf16.mxu0 0
        %1580 = vmatpush2.bf16.xpose.msra.mxu0 0
        %1581 = vmatprep.subr.bf16.mxu0 0
        %1582 = vmatpush2.bf16.xpose.msra.mxu0 0
        %1583 = vmatprep.subr.bf16.mxu0 0
        %1584 = vmatpush2.bf16.xpose.msra.mxu0 0
        %1585 = vmatprep.mubr.bf16.mxu0 0
        %1586 = vmatmul.mubr.bf16.gmra.mxu0 %v1539
        %v1587 = vpop.f32.mrf.mxu0
        %v1588 = vadd.f32 0.0, %v1587
        %v1589 = vpop.f32.mrf.mxu0
        %v1590 = vpop.f32.mrf.mxu0
        %v1591 = vpop.f32.mrf.mxu0
        %1592 = vdwg.mxu0
        %1593 = vst.msk [vmem:[%s163 + $0x18] sm:$0xff] %vm430, %v1588
        %v1594 = vpack.c.bf16 %v600, %v600
        %v1595 = vpack.c.bf16 %v550, %v550
        %v1596 = vpack.c.bf16 %v582, %v582
        %1597 = vxpose.xlu0.c.b16.start [1/8] %v1594, 128
        %1598 = vxpose.xlu0.c.b16.cont [2/8] 0, 128
        %1599 = vxpose.xlu0.c.b16.cont [3/8] 0, 128
        %1600 = vxpose.xlu0.c.b16.cont [4/8] 0, 128
        %1601 = vxpose.xlu0.c.b16.cont [5/8] 0, 128
        %1602 = vxpose.xlu0.c.b16.cont [6/8] 0, 128
        %1603 = vxpose.xlu0.c.b16.cont [7/8] 0, 128
        %1604 = vxpose.xlu0.c.b16.end [8/8] 0, 128
        %v1605 = vpop.trf.xlu0
        %v1606 = vpop.trf.xlu0
        %v1607 = vpop.trf.xlu0
        %v1608 = vpop.trf.xlu0
        %v1609 = vpop.trf.xlu0
        %v1610 = vpop.trf.xlu0
        %v1611 = vpop.trf.xlu0
        %v1612 = vpop.trf.xlu0
        %v1614 = vsel %vm623, %v1605, 0
        %v1617 = vsel %vm623, %v1606, 0
        %v1620 = vsel %vm623, %v1607, 0
        %v1623 = vsel %vm623, %v1608, 0
        %v1626 = vsel %vm636, %v1595, 0
        %1628 = vmatprep.subr.bf16.mxu0 0
        %1629 = vmatpush1.bf16.msra.mxu0 0
        %1630 = vmatprep.subr.bf16.mxu0 0
        %1631 = vmatpush1.bf16.msra.mxu0 0
        %1632 = vmatprep.subr.bf16.mxu0 0
        %1633 = vmatpush1.bf16.msra.mxu0 0
        %1634 = vmatprep.subr.bf16.mxu0 0
        %1635 = vmatpush1.bf16.msra.mxu0 0
        %1636 = vmatprep.subr.bf16.mxu0 0
        %1637 = vmatpush1.bf16.msra.mxu0 0
        %1638 = vmatprep.subr.bf16.mxu0 0
        %1639 = vmatpush1.bf16.msra.mxu0 0
        %1640 = vmatprep.subr.bf16.mxu0 0
        %1641 = vmatpush1.bf16.msra.mxu0 0
        %1642 = vmatprep.subr.bf16.mxu0 0
        %1643 = vmatpush1.bf16.msra.mxu0 %v1626
        %1644 = vmatprep.subr.bf16.mxu0 0
        %1645 = vmatpush2.bf16.msra.mxu0 0
        %1646 = vmatprep.subr.bf16.mxu0 0
        %1647 = vmatpush2.bf16.msra.mxu0 0
        %1648 = vmatprep.subr.bf16.mxu0 0
        %1649 = vmatpush2.bf16.msra.mxu0 0
        %1650 = vmatprep.subr.bf16.mxu0 0
        %1651 = vmatpush2.bf16.msra.mxu0 0
        %1652 = vmatprep.subr.bf16.mxu0 0
        %1653 = vmatpush2.bf16.msra.mxu0 0
        %1654 = vmatprep.subr.bf16.mxu0 0
        %1655 = vmatpush2.bf16.msra.mxu0 0
        %1656 = vmatprep.subr.bf16.mxu0 0
        %1657 = vmatpush2.bf16.msra.mxu0 0
        %1658 = vmatprep.subr.bf16.mxu0 0
        %1659 = vmatpush2.bf16.msra.mxu0 0
        %1660 = vmatprep.mubr.bf16.mxu0 0
        %1661 = vmatmul.mubr.bf16.gmra.mxu0 %v1614
        %v1662 = vpop.f32.mrf.mxu0
        %v1663 = vadd.f32 0.0, %v1662
        %v1664 = vpop.f32.mrf.mxu0
        %v1665 = vpop.f32.mrf.mxu0
        %v1666 = vadd.f32 0.0, %v1665
        %v1667 = vpop.f32.mrf.mxu0
        %1668 = vmatprep.mubr.bf16.mxu0 0
        %1669 = vmatmul.mubr.bf16.gmra.mxu0 %v1617
        %v1670 = vpop.f32.mrf.mxu0
        %v1671 = vadd.f32 0.0, %v1670
        %v1672 = vpop.f32.mrf.mxu0
        %v1673 = vpop.f32.mrf.mxu0
        %v1674 = vadd.f32 0.0, %v1673
        %v1675 = vpop.f32.mrf.mxu0
        %1676 = vmatprep.mubr.bf16.mxu0 0
        %1677 = vmatmul.mubr.bf16.gmra.mxu0 %v1620
        %v1678 = vpop.f32.mrf.mxu0
        %v1679 = vadd.f32 0.0, %v1678
        %v1680 = vpop.f32.mrf.mxu0
        %v1681 = vpop.f32.mrf.mxu0
        %v1682 = vadd.f32 0.0, %v1681
        %v1683 = vpop.f32.mrf.mxu0
        %1684 = vmatprep.mubr.bf16.mxu0 0
        %1685 = vmatmul.mubr.bf16.gmra.mxu0 %v1623
        %v1686 = vpop.f32.mrf.mxu0
        %v1687 = vadd.f32 0.0, %v1686
        %v1688 = vpop.f32.mrf.mxu0
        %v1689 = vpop.f32.mrf.mxu0
        %v1690 = vadd.f32 0.0, %v1689
        %v1691 = vpop.f32.mrf.mxu0
        %1692 = vdwg.mxu0
        %v1693 = vsel %vm430, %v1663, -inf
        %1694 = vmax.xlane.f32.xlu0 %v1693
        %v1695 = vpop.xlane.xlu0 %1694
        %v1696 = vsel %vm430, %v1666, -inf
        %1697 = vmax.xlane.f32.xlu0 %v1696
        %v1698 = vpop.xlane.xlu0 %1697
        %v1699 = vsel %vm430, %v1671, -inf
        %1700 = vmax.xlane.f32.xlu0 %v1699
        %v1701 = vpop.xlane.xlu0 %1700
        %v1702 = vsel %vm430, %v1674, -inf
        %1703 = vmax.xlane.f32.xlu0 %v1702
        %v1704 = vpop.xlane.xlu0 %1703
        %v1705 = vsel %vm430, %v1679, -inf
        %1706 = vmax.xlane.f32.xlu0 %v1705
        %v1707 = vpop.xlane.xlu0 %1706
        %v1708 = vsel %vm430, %v1682, -inf
        %1709 = vmax.xlane.f32.xlu0 %v1708
        %v1710 = vpop.xlane.xlu0 %1709
        %v1711 = vsel %vm430, %v1687, -inf
        %1712 = vmax.xlane.f32.xlu0 %v1711
        %v1713 = vpop.xlane.xlu0 %1712
        %v1714 = vsel %vm430, %v1690, -inf
        %1715 = vmax.xlane.f32.xlu0 %v1714
        %v1716 = vpop.xlane.xlu0 %1715
        %v1717 = vsub.f32 %v1663, %v1695
        %v1718 = vsub.f32 %v1666, %v1698
        %v1719 = vsub.f32 %v1671, %v1701
        %v1720 = vsub.f32 %v1674, %v1704
        %v1721 = vsub.f32 %v1679, %v1707
        %v1722 = vsub.f32 %v1682, %v1710
        %v1723 = vsub.f32 %v1687, %v1713
        %v1724 = vsub.f32 %v1690, %v1716
        %v1725 = vmul.f32 %v1717, 1.442695
        %v1726 = vpow.pop %v1725
        %v1727 = vmul.f32 %v1718, 1.442695
        %v1728 = vpow.pop %v1727
        %v1729 = vmul.f32 %v1719, 1.442695
        %v1730 = vpow.pop %v1729
        %v1731 = vmul.f32 %v1720, 1.442695
        %v1732 = vpow.pop %v1731
        %v1733 = vmul.f32 %v1721, 1.442695
        %v1734 = vpow.pop %v1733
        %v1735 = vmul.f32 %v1722, 1.442695
        %v1736 = vpow.pop %v1735
        %v1737 = vmul.f32 %v1723, 1.442695
        %v1738 = vpow.pop %v1737
        %v1739 = vmul.f32 %v1724, 1.442695
        %v1740 = vpow.pop %v1739
        %v1741 = vsel %vm430, %v1726, 0.0
        %1742 = vadd.xlane.f32.xlu0 %v1741
        %v1743 = vpop.xlane.xlu0 %1742
        %v1744 = vsel %vm430, %v1728, 0.0
        %1745 = vadd.xlane.f32.xlu0 %v1744
        %v1746 = vpop.xlane.xlu0 %1745
        %v1747 = vsel %vm430, %v1730, 0.0
        %1748 = vadd.xlane.f32.xlu0 %v1747
        %v1749 = vpop.xlane.xlu0 %1748
        %v1750 = vsel %vm430, %v1732, 0.0
        %1751 = vadd.xlane.f32.xlu0 %v1750
        %v1752 = vpop.xlane.xlu0 %1751
        %v1753 = vsel %vm430, %v1734, 0.0
        %1754 = vadd.xlane.f32.xlu0 %v1753
        %v1755 = vpop.xlane.xlu0 %1754
        %v1756 = vsel %vm430, %v1736, 0.0
        %1757 = vadd.xlane.f32.xlu0 %v1756
        %v1758 = vpop.xlane.xlu0 %1757
        %v1759 = vsel %vm430, %v1738, 0.0
        %1760 = vadd.xlane.f32.xlu0 %v1759
        %v1761 = vpop.xlane.xlu0 %1760
        %v1762 = vsel %vm430, %v1740, 0.0
        %1763 = vadd.xlane.f32.xlu0 %v1762
        %v1764 = vpop.xlane.xlu0 %1763
        %v1765 = vrcp.pop %v1743
        %v1766 = vrcp.pop %v1746
        %v1767 = vrcp.pop %v1749
        %v1768 = vrcp.pop %v1752
        %v1769 = vrcp.pop %v1755
        %v1770 = vrcp.pop %v1758
        %v1771 = vrcp.pop %v1761
        %v1772 = vrcp.pop %v1764
        %v1773 = vmul.f32 %v1726, %v1765
        %v1774 = vmul.f32 %v1728, %v1766
        %v1775 = vmul.f32 %v1730, %v1767
        %v1776 = vmul.f32 %v1732, %v1768
        %v1777 = vmul.f32 %v1734, %v1769
        %v1778 = vmul.f32 %v1736, %v1770
        %v1779 = vmul.f32 %v1738, %v1771
        %v1780 = vmul.f32 %v1740, %v1772
        %v1781 = vpack.c.bf16 %v1774, %v1773
        %v1782 = vpack.c.bf16 %v1776, %v1775
        %v1783 = vpack.c.bf16 %v1778, %v1777
        %v1784 = vpack.c.bf16 %v1780, %v1779
        %v1786 = vsel %vm430, %v1596, 0
        %v1789 = vsel %vm430, %v1781, 0
        %v1792 = vsel %vm430, %v1782, 0
        %v1795 = vsel %vm430, %v1783, 0
        %v1798 = vsel %vm430, %v1784, 0
        %1800 = vmatprep.subr.bf16.mxu0 0
        %1801 = vmatpush1.bf16.xpose.msra.mxu0 0
        %1802 = vmatprep.subr.bf16.mxu0 0
        %1803 = vmatpush1.bf16.xpose.msra.mxu0 0
        %1804 = vmatprep.subr.bf16.mxu0 0
        %1805 = vmatpush1.bf16.xpose.msra.mxu0 0
        %1806 = vmatprep.subr.bf16.mxu0 0
        %1807 = vmatpush1.bf16.xpose.msra.mxu0 0
        %1808 = vmatprep.subr.bf16.mxu0 0
        %1809 = vmatpush1.bf16.xpose.msra.mxu0 %v1798
        %1810 = vmatprep.subr.bf16.mxu0 0
        %1811 = vmatpush1.bf16.xpose.msra.mxu0 %v1795
        %1812 = vmatprep.subr.bf16.mxu0 0
        %1813 = vmatpush1.bf16.xpose.msra.mxu0 %v1792
        %1814 = vmatprep.subr.bf16.mxu0 0
        %1815 = vmatpush1.bf16.xpose.msra.mxu0 %v1789
        %1816 = vmatprep.subr.bf16.mxu0 0
        %1817 = vmatpush2.bf16.xpose.msra.mxu0 0
        %1818 = vmatprep.subr.bf16.mxu0 0
        %1819 = vmatpush2.bf16.xpose.msra.mxu0 0
        %1820 = vmatprep.subr.bf16.mxu0 0
        %1821 = vmatpush2.bf16.xpose.msra.mxu0 0
        %1822 = vmatprep.subr.bf16.mxu0 0
        %1823 = vmatpush2.bf16.xpose.msra.mxu0 0
        %1824 = vmatprep.subr.bf16.mxu0 0
        %1825 = vmatpush2.bf16.xpose.msra.mxu0 0
        %1826 = vmatprep.subr.bf16.mxu0 0
        %1827 = vmatpush2.bf16.xpose.msra.mxu0 0
        %1828 = vmatprep.subr.bf16.mxu0 0
        %1829 = vmatpush2.bf16.xpose.msra.mxu0 0
        %1830 = vmatprep.subr.bf16.mxu0 0
        %1831 = vmatpush2.bf16.xpose.msra.mxu0 0
        %1832 = vmatprep.mubr.bf16.mxu0 0
        %1833 = vmatmul.mubr.bf16.gmra.mxu0 %v1786
        %v1834 = vpop.f32.mrf.mxu0
        %v1835 = vadd.f32 0.0, %v1834
        %v1836 = vpop.f32.mrf.mxu0
        %v1837 = vpop.f32.mrf.mxu0
        %v1838 = vpop.f32.mrf.mxu0
        %1839 = vdwg.mxu0
        %1840 = vst.msk [vmem:[%s163 + $0x20] sm:$0xff] %vm430, %v1835
        %v1841 = vpack.c.bf16 %v601, %v601
        %v1842 = vpack.c.bf16 %v553, %v553
        %v1843 = vpack.c.bf16 %v585, %v585
        %1844 = vxpose.xlu0.c.b16.start [1/8] %v1841, 128
        %1845 = vxpose.xlu0.c.b16.cont [2/8] 0, 128
        %1846 = vxpose.xlu0.c.b16.cont [3/8] 0, 128
        %1847 = vxpose.xlu0.c.b16.cont [4/8] 0, 128
        %1848 = vxpose.xlu0.c.b16.cont [5/8] 0, 128
        %1849 = vxpose.xlu0.c.b16.cont [6/8] 0, 128
        %1850 = vxpose.xlu0.c.b16.cont [7/8] 0, 128
        %1851 = vxpose.xlu0.c.b16.end [8/8] 0, 128
        %v1852 = vpop.trf.xlu0
        %v1853 = vpop.trf.xlu0
        %v1854 = vpop.trf.xlu0
        %v1855 = vpop.trf.xlu0
        %v1856 = vpop.trf.xlu0
        %v1857 = vpop.trf.xlu0
        %v1858 = vpop.trf.xlu0
        %v1859 = vpop.trf.xlu0
        %v1861 = vsel %vm623, %v1852, 0
        %v1864 = vsel %vm623, %v1853, 0
        %v1867 = vsel %vm623, %v1854, 0
        %v1870 = vsel %vm623, %v1855, 0
        %v1873 = vsel %vm636, %v1842, 0
        %1875 = vmatprep.subr.bf16.mxu0 0
        %1876 = vmatpush1.bf16.msra.mxu0 0
        %1877 = vmatprep.subr.bf16.mxu0 0
        %1878 = vmatpush1.bf16.msra.mxu0 0
        %1879 = vmatprep.subr.bf16.mxu0 0
        %1880 = vmatpush1.bf16.msra.mxu0 0
        %1881 = vmatprep.subr.bf16.mxu0 0
        %1882 = vmatpush1.bf16.msra.mxu0 0
        %1883 = vmatprep.subr.bf16.mxu0 0
        %1884 = vmatpush1.bf16.msra.mxu0 0
        %1885 = vmatprep.subr.bf16.mxu0 0
        %1886 = vmatpush1.bf16.msra.mxu0 0
        %1887 = vmatprep.subr.bf16.mxu0 0
        %1888 = vmatpush1.bf16.msra.mxu0 0
        %1889 = vmatprep.subr.bf16.mxu0 0
        %1890 = vmatpush1.bf16.msra.mxu0 %v1873
        %1891 = vmatprep.subr.bf16.mxu0 0
        %1892 = vmatpush2.bf16.msra.mxu0 0
        %1893 = vmatprep.subr.bf16.mxu0 0
        %1894 = vmatpush2.bf16.msra.mxu0 0
        %1895 = vmatprep.subr.bf16.mxu0 0
        %1896 = vmatpush2.bf16.msra.mxu0 0
        %1897 = vmatprep.subr.bf16.mxu0 0
        %1898 = vmatpush2.bf16.msra.mxu0 0
        %1899 = vmatprep.subr.bf16.mxu0 0
        %1900 = vmatpush2.bf16.msra.mxu0 0
        %1901 = vmatprep.subr.bf16.mxu0 0
        %1902 = vmatpush2.bf16.msra.mxu0 0
        %1903 = vmatprep.subr.bf16.mxu0 0
        %1904 = vmatpush2.bf16.msra.mxu0 0
        %1905 = vmatprep.subr.bf16.mxu0 0
        %1906 = vmatpush2.bf16.msra.mxu0 0
        %1907 = vmatprep.mubr.bf16.mxu0 0
        %1908 = vmatmul.mubr.bf16.gmra.mxu0 %v1861
        %v1909 = vpop.f32.mrf.mxu0
        %v1910 = vadd.f32 0.0, %v1909
        %v1911 = vpop.f32.mrf.mxu0
        %v1912 = vpop.f32.mrf.mxu0
        %v1913 = vadd.f32 0.0, %v1912
        %v1914 = vpop.f32.mrf.mxu0
        %1915 = vmatprep.mubr.bf16.mxu0 0
        %1916 = vmatmul.mubr.bf16.gmra.mxu0 %v1864
        %v1917 = vpop.f32.mrf.mxu0
        %v1918 = vadd.f32 0.0, %v1917
        %v1919 = vpop.f32.mrf.mxu0
        %v1920 = vpop.f32.mrf.mxu0
        %v1921 = vadd.f32 0.0, %v1920
        %v1922 = vpop.f32.mrf.mxu0
        %1923 = vmatprep.mubr.bf16.mxu0 0
        %1924 = vmatmul.mubr.bf16.gmra.mxu0 %v1867
        %v1925 = vpop.f32.mrf.mxu0
        %v1926 = vadd.f32 0.0, %v1925
        %v1927 = vpop.f32.mrf.mxu0
        %v1928 = vpop.f32.mrf.mxu0
        %v1929 = vadd.f32 0.0, %v1928
        %v1930 = vpop.f32.mrf.mxu0
        %1931 = vmatprep.mubr.bf16.mxu0 0
        %1932 = vmatmul.mubr.bf16.gmra.mxu0 %v1870
        %v1933 = vpop.f32.mrf.mxu0
        %v1934 = vadd.f32 0.0, %v1933
        %v1935 = vpop.f32.mrf.mxu0
        %v1936 = vpop.f32.mrf.mxu0
        %v1937 = vadd.f32 0.0, %v1936
        %v1938 = vpop.f32.mrf.mxu0
        %1939 = vdwg.mxu0
        %v1940 = vsel %vm430, %v1910, -inf
        %1941 = vmax.xlane.f32.xlu0 %v1940
        %v1942 = vpop.xlane.xlu0 %1941
        %v1943 = vsel %vm430, %v1913, -inf
        %1944 = vmax.xlane.f32.xlu0 %v1943
        %v1945 = vpop.xlane.xlu0 %1944
        %v1946 = vsel %vm430, %v1918, -inf
        %1947 = vmax.xlane.f32.xlu0 %v1946
        %v1948 = vpop.xlane.xlu0 %1947
        %v1949 = vsel %vm430, %v1921, -inf
        %1950 = vmax.xlane.f32.xlu0 %v1949
        %v1951 = vpop.xlane.xlu0 %1950
        %v1952 = vsel %vm430, %v1926, -inf
        %1953 = vmax.xlane.f32.xlu0 %v1952
        %v1954 = vpop.xlane.xlu0 %1953
        %v1955 = vsel %vm430, %v1929, -inf
        %1956 = vmax.xlane.f32.xlu0 %v1955
        %v1957 = vpop.xlane.xlu0 %1956
        %v1958 = vsel %vm430, %v1934, -inf
        %1959 = vmax.xlane.f32.xlu0 %v1958
        %v1960 = vpop.xlane.xlu0 %1959
        %v1961 = vsel %vm430, %v1937, -inf
        %1962 = vmax.xlane.f32.xlu0 %v1961
        %v1963 = vpop.xlane.xlu0 %1962
        %v1964 = vsub.f32 %v1910, %v1942
        %v1965 = vsub.f32 %v1913, %v1945
        %v1966 = vsub.f32 %v1918, %v1948
        %v1967 = vsub.f32 %v1921, %v1951
        %v1968 = vsub.f32 %v1926, %v1954
        %v1969 = vsub.f32 %v1929, %v1957
        %v1970 = vsub.f32 %v1934, %v1960
        %v1971 = vsub.f32 %v1937, %v1963
        %v1972 = vmul.f32 %v1964, 1.442695
        %v1973 = vpow.pop %v1972
        %v1974 = vmul.f32 %v1965, 1.442695
        %v1975 = vpow.pop %v1974
        %v1976 = vmul.f32 %v1966, 1.442695
        %v1977 = vpow.pop %v1976
        %v1978 = vmul.f32 %v1967, 1.442695
        %v1979 = vpow.pop %v1978
        %v1980 = vmul.f32 %v1968, 1.442695
        %v1981 = vpow.pop %v1980
        %v1982 = vmul.f32 %v1969, 1.442695
        %v1983 = vpow.pop %v1982
        %v1984 = vmul.f32 %v1970, 1.442695
        %v1985 = vpow.pop %v1984
        %v1986 = vmul.f32 %v1971, 1.442695
        %v1987 = vpow.pop %v1986
        %v1988 = vsel %vm430, %v1973, 0.0
        %1989 = vadd.xlane.f32.xlu0 %v1988
        %v1990 = vpop.xlane.xlu0 %1989
        %v1991 = vsel %vm430, %v1975, 0.0
        %1992 = vadd.xlane.f32.xlu0 %v1991
        %v1993 = vpop.xlane.xlu0 %1992
        %v1994 = vsel %vm430, %v1977, 0.0
        %1995 = vadd.xlane.f32.xlu0 %v1994
        %v1996 = vpop.xlane.xlu0 %1995
        %v1997 = vsel %vm430, %v1979, 0.0
        %1998 = vadd.xlane.f32.xlu0 %v1997
        %v1999 = vpop.xlane.xlu0 %1998
        %v2000 = vsel %vm430, %v1981, 0.0
        %2001 = vadd.xlane.f32.xlu0 %v2000
        %v2002 = vpop.xlane.xlu0 %2001
        %v2003 = vsel %vm430, %v1983, 0.0
        %2004 = vadd.xlane.f32.xlu0 %v2003
        %v2005 = vpop.xlane.xlu0 %2004
        %v2006 = vsel %vm430, %v1985, 0.0
        %2007 = vadd.xlane.f32.xlu0 %v2006
        %v2008 = vpop.xlane.xlu0 %2007
        %v2009 = vsel %vm430, %v1987, 0.0
        %2010 = vadd.xlane.f32.xlu0 %v2009
        %v2011 = vpop.xlane.xlu0 %2010
        %v2012 = vrcp.pop %v1990
        %v2013 = vrcp.pop %v1993
        %v2014 = vrcp.pop %v1996
        %v2015 = vrcp.pop %v1999
        %v2016 = vrcp.pop %v2002
        %v2017 = vrcp.pop %v2005
        %v2018 = vrcp.pop %v2008
        %v2019 = vrcp.pop %v2011
        %v2020 = vmul.f32 %v1973, %v2012
        %v2021 = vmul.f32 %v1975, %v2013
        %v2022 = vmul.f32 %v1977, %v2014
        %v2023 = vmul.f32 %v1979, %v2015
        %v2024 = vmul.f32 %v1981, %v2016
        %v2025 = vmul.f32 %v1983, %v2017
        %v2026 = vmul.f32 %v1985, %v2018
        %v2027 = vmul.f32 %v1987, %v2019
        %v2028 = vpack.c.bf16 %v2021, %v2020
        %v2029 = vpack.c.bf16 %v2023, %v2022
        %v2030 = vpack.c.bf16 %v2025, %v2024
        %v2031 = vpack.c.bf16 %v2027, %v2026
        %v2033 = vsel %vm430, %v1843, 0
        %v2036 = vsel %vm430, %v2028, 0
        %v2039 = vsel %vm430, %v2029, 0
        %v2042 = vsel %vm430, %v2030, 0
        %v2045 = vsel %vm430, %v2031, 0
        %2047 = vmatprep.subr.bf16.mxu0 0
        %2048 = vmatpush1.bf16.xpose.msra.mxu0 0
        %2049 = vmatprep.subr.bf16.mxu0 0
        %2050 = vmatpush1.bf16.xpose.msra.mxu0 0
        %2051 = vmatprep.subr.bf16.mxu0 0
        %2052 = vmatpush1.bf16.xpose.msra.mxu0 0
        %2053 = vmatprep.subr.bf16.mxu0 0
        %2054 = vmatpush1.bf16.xpose.msra.mxu0 0
        %2055 = vmatprep.subr.bf16.mxu0 0
        %2056 = vmatpush1.bf16.xpose.msra.mxu0 %v2045
        %2057 = vmatprep.subr.bf16.mxu0 0
        %2058 = vmatpush1.bf16.xpose.msra.mxu0 %v2042
        %2059 = vmatprep.subr.bf16.mxu0 0
        %2060 = vmatpush1.bf16.xpose.msra.mxu0 %v2039
        %2061 = vmatprep.subr.bf16.mxu0 0
        %2062 = vmatpush1.bf16.xpose.msra.mxu0 %v2036
        %2063 = vmatprep.subr.bf16.mxu0 0
        %2064 = vmatpush2.bf16.xpose.msra.mxu0 0
        %2065 = vmatprep.subr.bf16.mxu0 0
        %2066 = vmatpush2.bf16.xpose.msra.mxu0 0
        %2067 = vmatprep.subr.bf16.mxu0 0
        %2068 = vmatpush2.bf16.xpose.msra.mxu0 0
        %2069 = vmatprep.subr.bf16.mxu0 0
        %2070 = vmatpush2.bf16.xpose.msra.mxu0 0
        %2071 = vmatprep.subr.bf16.mxu0 0
        %2072 = vmatpush2.bf16.xpose.msra.mxu0 0
        %2073 = vmatprep.subr.bf16.mxu0 0
        %2074 = vmatpush2.bf16.xpose.msra.mxu0 0
        %2075 = vmatprep.subr.bf16.mxu0 0
        %2076 = vmatpush2.bf16.xpose.msra.mxu0 0
        %2077 = vmatprep.subr.bf16.mxu0 0
        %2078 = vmatpush2.bf16.xpose.msra.mxu0 0
        %2079 = vmatprep.mubr.bf16.mxu0 0
        %2080 = vmatmul.mubr.bf16.gmra.mxu0 %v2033
        %v2081 = vpop.f32.mrf.mxu0
        %v2082 = vadd.f32 0.0, %v2081
        %v2083 = vpop.f32.mrf.mxu0
        %v2084 = vpop.f32.mrf.mxu0
        %v2085 = vpop.f32.mrf.mxu0
        %2086 = vdwg.mxu0
        %2087 = vst.msk [vmem:[%s163 + $0x28] sm:$0xff] %vm430, %v2082
        %v2088 = vpack.c.bf16 %v602, %v602
        %v2089 = vpack.c.bf16 %v558, %v558
        %v2090 = vpack.c.bf16 %v590, %v590
        %2091 = vxpose.xlu0.c.b16.start [1/8] %v2088, 128
        %2092 = vxpose.xlu0.c.b16.cont [2/8] 0, 128
        %2093 = vxpose.xlu0.c.b16.cont [3/8] 0, 128
        %2094 = vxpose.xlu0.c.b16.cont [4/8] 0, 128
        %2095 = vxpose.xlu0.c.b16.cont [5/8] 0, 128
        %2096 = vxpose.xlu0.c.b16.cont [6/8] 0, 128
        %2097 = vxpose.xlu0.c.b16.cont [7/8] 0, 128
        %2098 = vxpose.xlu0.c.b16.end [8/8] 0, 128
        %v2099 = vpop.trf.xlu0
        %v2100 = vpop.trf.xlu0
        %v2101 = vpop.trf.xlu0
        %v2102 = vpop.trf.xlu0
        %v2103 = vpop.trf.xlu0
        %v2104 = vpop.trf.xlu0
        %v2105 = vpop.trf.xlu0
        %v2106 = vpop.trf.xlu0
        %v2108 = vsel %vm623, %v2099, 0
        %v2111 = vsel %vm623, %v2100, 0
        %v2114 = vsel %vm623, %v2101, 0
        %v2117 = vsel %vm623, %v2102, 0
        %v2120 = vsel %vm636, %v2089, 0
        %2122 = vmatprep.subr.bf16.mxu0 0
        %2123 = vmatpush1.bf16.msra.mxu0 0
        %2124 = vmatprep.subr.bf16.mxu0 0
        %2125 = vmatpush1.bf16.msra.mxu0 0
        %2126 = vmatprep.subr.bf16.mxu0 0
        %2127 = vmatpush1.bf16.msra.mxu0 0
        %2128 = vmatprep.subr.bf16.mxu0 0
        %2129 = vmatpush1.bf16.msra.mxu0 0
        %2130 = vmatprep.subr.bf16.mxu0 0
        %2131 = vmatpush1.bf16.msra.mxu0 0
        %2132 = vmatprep.subr.bf16.mxu0 0
        %2133 = vmatpush1.bf16.msra.mxu0 0
        %2134 = vmatprep.subr.bf16.mxu0 0
        %2135 = vmatpush1.bf16.msra.mxu0 0
        %2136 = vmatprep.subr.bf16.mxu0 0
        %2137 = vmatpush1.bf16.msra.mxu0 %v2120
        %2138 = vmatprep.subr.bf16.mxu0 0
        %2139 = vmatpush2.bf16.msra.mxu0 0
        %2140 = vmatprep.subr.bf16.mxu0 0
        %2141 = vmatpush2.bf16.msra.mxu0 0
        %2142 = vmatprep.subr.bf16.mxu0 0
        %2143 = vmatpush2.bf16.msra.mxu0 0
        %2144 = vmatprep.subr.bf16.mxu0 0
        %2145 = vmatpush2.bf16.msra.mxu0 0
        %2146 = vmatprep.subr.bf16.mxu0 0
        %2147 = vmatpush2.bf16.msra.mxu0 0
        %2148 = vmatprep.subr.bf16.mxu0 0
        %2149 = vmatpush2.bf16.msra.mxu0 0
        %2150 = vmatprep.subr.bf16.mxu0 0
        %2151 = vmatpush2.bf16.msra.mxu0 0
        %2152 = vmatprep.subr.bf16.mxu0 0
        %2153 = vmatpush2.bf16.msra.mxu0 0
        %2154 = vmatprep.mubr.bf16.mxu0 0
        %2155 = vmatmul.mubr.bf16.gmra.mxu0 %v2108
        %v2156 = vpop.f32.mrf.mxu0
        %v2157 = vadd.f32 0.0, %v2156
        %v2158 = vpop.f32.mrf.mxu0
        %v2159 = vpop.f32.mrf.mxu0
        %v2160 = vadd.f32 0.0, %v2159
        %v2161 = vpop.f32.mrf.mxu0
        %2162 = vmatprep.mubr.bf16.mxu0 0
        %2163 = vmatmul.mubr.bf16.gmra.mxu0 %v2111
        %v2164 = vpop.f32.mrf.mxu0
        %v2165 = vadd.f32 0.0, %v2164
        %v2166 = vpop.f32.mrf.mxu0
        %v2167 = vpop.f32.mrf.mxu0
        %v2168 = vadd.f32 0.0, %v2167
        %v2169 = vpop.f32.mrf.mxu0
        %2170 = vmatprep.mubr.bf16.mxu0 0
        %2171 = vmatmul.mubr.bf16.gmra.mxu0 %v2114
        %v2172 = vpop.f32.mrf.mxu0
        %v2173 = vadd.f32 0.0, %v2172
        %v2174 = vpop.f32.mrf.mxu0
        %v2175 = vpop.f32.mrf.mxu0
        %v2176 = vadd.f32 0.0, %v2175
        %v2177 = vpop.f32.mrf.mxu0
        %2178 = vmatprep.mubr.bf16.mxu0 0
        %2179 = vmatmul.mubr.bf16.gmra.mxu0 %v2117
        %v2180 = vpop.f32.mrf.mxu0
        %v2181 = vadd.f32 0.0, %v2180
        %v2182 = vpop.f32.mrf.mxu0
        %v2183 = vpop.f32.mrf.mxu0
        %v2184 = vadd.f32 0.0, %v2183
        %v2185 = vpop.f32.mrf.mxu0
        %2186 = vdwg.mxu0
        %v2187 = vsel %vm430, %v2157, -inf
        %2188 = vmax.xlane.f32.xlu0 %v2187
        %v2189 = vpop.xlane.xlu0 %2188
        %v2190 = vsel %vm430, %v2160, -inf
        %2191 = vmax.xlane.f32.xlu0 %v2190
        %v2192 = vpop.xlane.xlu0 %2191
        %v2193 = vsel %vm430, %v2165, -inf
        %2194 = vmax.xlane.f32.xlu0 %v2193
        %v2195 = vpop.xlane.xlu0 %2194
        %v2196 = vsel %vm430, %v2168, -inf
        %2197 = vmax.xlane.f32.xlu0 %v2196
        %v2198 = vpop.xlane.xlu0 %2197
        %v2199 = vsel %vm430, %v2173, -inf
        %2200 = vmax.xlane.f32.xlu0 %v2199
        %v2201 = vpop.xlane.xlu0 %2200
        %v2202 = vsel %vm430, %v2176, -inf
        %2203 = vmax.xlane.f32.xlu0 %v2202
        %v2204 = vpop.xlane.xlu0 %2203
        %v2205 = vsel %vm430, %v2181, -inf
        %2206 = vmax.xlane.f32.xlu0 %v2205
        %v2207 = vpop.xlane.xlu0 %2206
        %v2208 = vsel %vm430, %v2184, -inf
        %2209 = vmax.xlane.f32.xlu0 %v2208
        %v2210 = vpop.xlane.xlu0 %2209
        %v2211 = vsub.f32 %v2157, %v2189
        %v2212 = vsub.f32 %v2160, %v2192
        %v2213 = vsub.f32 %v2165, %v2195
        %v2214 = vsub.f32 %v2168, %v2198
        %v2215 = vsub.f32 %v2173, %v2201
        %v2216 = vsub.f32 %v2176, %v2204
        %v2217 = vsub.f32 %v2181, %v2207
        %v2218 = vsub.f32 %v2184, %v2210
        %v2219 = vmul.f32 %v2211, 1.442695
        %v2220 = vpow.pop %v2219
        %v2221 = vmul.f32 %v2212, 1.442695
        %v2222 = vpow.pop %v2221
        %v2223 = vmul.f32 %v2213, 1.442695
        %v2224 = vpow.pop %v2223
        %v2225 = vmul.f32 %v2214, 1.442695
        %v2226 = vpow.pop %v2225
        %v2227 = vmul.f32 %v2215, 1.442695
        %v2228 = vpow.pop %v2227
        %v2229 = vmul.f32 %v2216, 1.442695
        %v2230 = vpow.pop %v2229
        %v2231 = vmul.f32 %v2217, 1.442695
        %v2232 = vpow.pop %v2231
        %v2233 = vmul.f32 %v2218, 1.442695
        %v2234 = vpow.pop %v2233
        %v2235 = vsel %vm430, %v2220, 0.0
        %2236 = vadd.xlane.f32.xlu0 %v2235
        %v2237 = vpop.xlane.xlu0 %2236
        %v2238 = vsel %vm430, %v2222, 0.0
        %2239 = vadd.xlane.f32.xlu0 %v2238
        %v2240 = vpop.xlane.xlu0 %2239
        %v2241 = vsel %vm430, %v2224, 0.0
        %2242 = vadd.xlane.f32.xlu0 %v2241
        %v2243 = vpop.xlane.xlu0 %2242
        %v2244 = vsel %vm430, %v2226, 0.0
        %2245 = vadd.xlane.f32.xlu0 %v2244
        %v2246 = vpop.xlane.xlu0 %2245
        %v2247 = vsel %vm430, %v2228, 0.0
        %2248 = vadd.xlane.f32.xlu0 %v2247
        %v2249 = vpop.xlane.xlu0 %2248
        %v2250 = vsel %vm430, %v2230, 0.0
        %2251 = vadd.xlane.f32.xlu0 %v2250
        %v2252 = vpop.xlane.xlu0 %2251
        %v2253 = vsel %vm430, %v2232, 0.0
        %2254 = vadd.xlane.f32.xlu0 %v2253
        %v2255 = vpop.xlane.xlu0 %2254
        %v2256 = vsel %vm430, %v2234, 0.0
        %2257 = vadd.xlane.f32.xlu0 %v2256
        %v2258 = vpop.xlane.xlu0 %2257
        %v2259 = vrcp.pop %v2237
        %v2260 = vrcp.pop %v2240
        %v2261 = vrcp.pop %v2243
        %v2262 = vrcp.pop %v2246
        %v2263 = vrcp.pop %v2249
        %v2264 = vrcp.pop %v2252
        %v2265 = vrcp.pop %v2255
        %v2266 = vrcp.pop %v2258
        %v2267 = vmul.f32 %v2220, %v2259
        %v2268 = vmul.f32 %v2222, %v2260
        %v2269 = vmul.f32 %v2224, %v2261
        %v2270 = vmul.f32 %v2226, %v2262
        %v2271 = vmul.f32 %v2228, %v2263
        %v2272 = vmul.f32 %v2230, %v2264
        %v2273 = vmul.f32 %v2232, %v2265
        %v2274 = vmul.f32 %v2234, %v2266
        %v2275 = vpack.c.bf16 %v2268, %v2267
        %v2276 = vpack.c.bf16 %v2270, %v2269
        %v2277 = vpack.c.bf16 %v2272, %v2271
        %v2278 = vpack.c.bf16 %v2274, %v2273
        %v2280 = vsel %vm430, %v2090, 0
        %v2283 = vsel %vm430, %v2275, 0
        %v2286 = vsel %vm430, %v2276, 0
        %v2289 = vsel %vm430, %v2277, 0
        %v2292 = vsel %vm430, %v2278, 0
        %2294 = vmatprep.subr.bf16.mxu0 0
        %2295 = vmatpush1.bf16.xpose.msra.mxu0 0
        %2296 = vmatprep.subr.bf16.mxu0 0
        %2297 = vmatpush1.bf16.xpose.msra.mxu0 0
        %2298 = vmatprep.subr.bf16.mxu0 0
        %2299 = vmatpush1.bf16.xpose.msra.mxu0 0
        %2300 = vmatprep.subr.bf16.mxu0 0
        %2301 = vmatpush1.bf16.xpose.msra.mxu0 0
        %2302 = vmatprep.subr.bf16.mxu0 0
        %2303 = vmatpush1.bf16.xpose.msra.mxu0 %v2292
        %2304 = vmatprep.subr.bf16.mxu0 0
        %2305 = vmatpush1.bf16.xpose.msra.mxu0 %v2289
        %2306 = vmatprep.subr.bf16.mxu0 0
        %2307 = vmatpush1.bf16.xpose.msra.mxu0 %v2286
        %2308 = vmatprep.subr.bf16.mxu0 0
        %2309 = vmatpush1.bf16.xpose.msra.mxu0 %v2283
        %2310 = vmatprep.subr.bf16.mxu0 0
        %2311 = vmatpush2.bf16.xpose.msra.mxu0 0
        %2312 = vmatprep.subr.bf16.mxu0 0
        %2313 = vmatpush2.bf16.xpose.msra.mxu0 0
        %2314 = vmatprep.subr.bf16.mxu0 0
        %2315 = vmatpush2.bf16.xpose.msra.mxu0 0
        %2316 = vmatprep.subr.bf16.mxu0 0
        %2317 = vmatpush2.bf16.xpose.msra.mxu0 0
        %2318 = vmatprep.subr.bf16.mxu0 0
        %2319 = vmatpush2.bf16.xpose.msra.mxu0 0
        %2320 = vmatprep.subr.bf16.mxu0 0
        %2321 = vmatpush2.bf16.xpose.msra.mxu0 0
        %2322 = vmatprep.subr.bf16.mxu0 0
        %2323 = vmatpush2.bf16.xpose.msra.mxu0 0
        %2324 = vmatprep.subr.bf16.mxu0 0
        %2325 = vmatpush2.bf16.xpose.msra.mxu0 0
        %2326 = vmatprep.mubr.bf16.mxu0 0
        %2327 = vmatmul.mubr.bf16.gmra.mxu0 %v2280
        %v2328 = vpop.f32.mrf.mxu0
        %v2329 = vadd.f32 0.0, %v2328
        %v2330 = vpop.f32.mrf.mxu0
        %v2331 = vpop.f32.mrf.mxu0
        %v2332 = vpop.f32.mrf.mxu0
        %2333 = vdwg.mxu0
        %2334 = vst.msk [vmem:[%s163 + $0x30] sm:$0xff] %vm430, %v2329
        %v2335 = vpack.c.bf16 %v603, %v603
        %v2336 = vpack.c.bf16 %v561, %v561
        %v2337 = vpack.c.bf16 %v593, %v593
        %2338 = vxpose.xlu0.c.b16.start [1/8] %v2335, 128
        %2339 = vxpose.xlu0.c.b16.cont [2/8] 0, 128
        %2340 = vxpose.xlu0.c.b16.cont [3/8] 0, 128
        %2341 = vxpose.xlu0.c.b16.cont [4/8] 0, 128
        %2342 = vxpose.xlu0.c.b16.cont [5/8] 0, 128
        %2343 = vxpose.xlu0.c.b16.cont [6/8] 0, 128
        %2344 = vxpose.xlu0.c.b16.cont [7/8] 0, 128
        %2345 = vxpose.xlu0.c.b16.end [8/8] 0, 128
        %v2346 = vpop.trf.xlu0
        %v2347 = vpop.trf.xlu0
        %v2348 = vpop.trf.xlu0
        %v2349 = vpop.trf.xlu0
        %v2350 = vpop.trf.xlu0
        %v2351 = vpop.trf.xlu0
        %v2352 = vpop.trf.xlu0
        %v2353 = vpop.trf.xlu0
        %v2355 = vsel %vm623, %v2346, 0
        %v2358 = vsel %vm623, %v2347, 0
        %v2361 = vsel %vm623, %v2348, 0
        %v2364 = vsel %vm623, %v2349, 0
        %v2367 = vsel %vm636, %v2336, 0
        %2369 = vmatprep.subr.bf16.mxu0 0
        %2370 = vmatpush1.bf16.msra.mxu0 0
        %2371 = vmatprep.subr.bf16.mxu0 0
        %2372 = vmatpush1.bf16.msra.mxu0 0
        %2373 = vmatprep.subr.bf16.mxu0 0
        %2374 = vmatpush1.bf16.msra.mxu0 0
        %2375 = vmatprep.subr.bf16.mxu0 0
        %2376 = vmatpush1.bf16.msra.mxu0 0
        %2377 = vmatprep.subr.bf16.mxu0 0
        %2378 = vmatpush1.bf16.msra.mxu0 0
        %2379 = vmatprep.subr.bf16.mxu0 0
        %2380 = vmatpush1.bf16.msra.mxu0 0
        %2381 = vmatprep.subr.bf16.mxu0 0
        %2382 = vmatpush1.bf16.msra.mxu0 0
        %2383 = vmatprep.subr.bf16.mxu0 0
        %2384 = vmatpush1.bf16.msra.mxu0 %v2367
        %2385 = vmatprep.subr.bf16.mxu0 0
        %2386 = vmatpush2.bf16.msra.mxu0 0
        %2387 = vmatprep.subr.bf16.mxu0 0
        %2388 = vmatpush2.bf16.msra.mxu0 0
        %2389 = vmatprep.subr.bf16.mxu0 0
        %2390 = vmatpush2.bf16.msra.mxu0 0
        %2391 = vmatprep.subr.bf16.mxu0 0
        %2392 = vmatpush2.bf16.msra.mxu0 0
        %2393 = vmatprep.subr.bf16.mxu0 0
        %2394 = vmatpush2.bf16.msra.mxu0 0
        %2395 = vmatprep.subr.bf16.mxu0 0
        %2396 = vmatpush2.bf16.msra.mxu0 0
        %2397 = vmatprep.subr.bf16.mxu0 0
        %2398 = vmatpush2.bf16.msra.mxu0 0
        %2399 = vmatprep.subr.bf16.mxu0 0
        %2400 = vmatpush2.bf16.msra.mxu0 0
        %2401 = vmatprep.mubr.bf16.mxu0 0
        %2402 = vmatmul.mubr.bf16.gmra.mxu0 %v2355
        %v2403 = vpop.f32.mrf.mxu0
        %v2404 = vadd.f32 0.0, %v2403
        %v2405 = vpop.f32.mrf.mxu0
        %v2406 = vpop.f32.mrf.mxu0
        %v2407 = vadd.f32 0.0, %v2406
        %v2408 = vpop.f32.mrf.mxu0
        %2409 = vmatprep.mubr.bf16.mxu0 0
        %2410 = vmatmul.mubr.bf16.gmra.mxu0 %v2358
        %v2411 = vpop.f32.mrf.mxu0
        %v2412 = vadd.f32 0.0, %v2411
        %v2413 = vpop.f32.mrf.mxu0
        %v2414 = vpop.f32.mrf.mxu0
        %v2415 = vadd.f32 0.0, %v2414
        %v2416 = vpop.f32.mrf.mxu0
        %2417 = vmatprep.mubr.bf16.mxu0 0
        %2418 = vmatmul.mubr.bf16.gmra.mxu0 %v2361
        %v2419 = vpop.f32.mrf.mxu0
        %v2420 = vadd.f32 0.0, %v2419
        %v2421 = vpop.f32.mrf.mxu0
        %v2422 = vpop.f32.mrf.mxu0
        %v2423 = vadd.f32 0.0, %v2422
        %v2424 = vpop.f32.mrf.mxu0
        %2425 = vmatprep.mubr.bf16.mxu0 0
        %2426 = vmatmul.mubr.bf16.gmra.mxu0 %v2364
        %v2427 = vpop.f32.mrf.mxu0
        %v2428 = vadd.f32 0.0, %v2427
        %v2429 = vpop.f32.mrf.mxu0
        %v2430 = vpop.f32.mrf.mxu0
        %v2431 = vadd.f32 0.0, %v2430
        %v2432 = vpop.f32.mrf.mxu0
        %2433 = vdwg.mxu0
        %v2434 = vsel %vm430, %v2404, -inf
        %2435 = vmax.xlane.f32.xlu0 %v2434
        %v2436 = vpop.xlane.xlu0 %2435
        %v2437 = vsel %vm430, %v2407, -inf
        %2438 = vmax.xlane.f32.xlu0 %v2437
        %v2439 = vpop.xlane.xlu0 %2438
        %v2440 = vsel %vm430, %v2412, -inf
        %2441 = vmax.xlane.f32.xlu0 %v2440
        %v2442 = vpop.xlane.xlu0 %2441
        %v2443 = vsel %vm430, %v2415, -inf
        %2444 = vmax.xlane.f32.xlu0 %v2443
        %v2445 = vpop.xlane.xlu0 %2444
        %v2446 = vsel %vm430, %v2420, -inf
        %2447 = vmax.xlane.f32.xlu0 %v2446
        %v2448 = vpop.xlane.xlu0 %2447
        %v2449 = vsel %vm430, %v2423, -inf
        %2450 = vmax.xlane.f32.xlu0 %v2449
        %v2451 = vpop.xlane.xlu0 %2450
        %v2452 = vsel %vm430, %v2428, -inf
        %2453 = vmax.xlane.f32.xlu0 %v2452
        %v2454 = vpop.xlane.xlu0 %2453
        %v2455 = vsel %vm430, %v2431, -inf
        %2456 = vmax.xlane.f32.xlu0 %v2455
        %v2457 = vpop.xlane.xlu0 %2456
        %v2458 = vsub.f32 %v2404, %v2436
        %v2459 = vsub.f32 %v2407, %v2439
        %v2460 = vsub.f32 %v2412, %v2442
        %v2461 = vsub.f32 %v2415, %v2445
        %v2462 = vsub.f32 %v2420, %v2448
        %v2463 = vsub.f32 %v2423, %v2451
        %v2464 = vsub.f32 %v2428, %v2454
        %v2465 = vsub.f32 %v2431, %v2457
        %v2466 = vmul.f32 %v2458, 1.442695
        %v2467 = vpow.pop %v2466
        %v2468 = vmul.f32 %v2459, 1.442695
        %v2469 = vpow.pop %v2468
        %v2470 = vmul.f32 %v2460, 1.442695
        %v2471 = vpow.pop %v2470
        %v2472 = vmul.f32 %v2461, 1.442695
        %v2473 = vpow.pop %v2472
        %v2474 = vmul.f32 %v2462, 1.442695
        %v2475 = vpow.pop %v2474
        %v2476 = vmul.f32 %v2463, 1.442695
        %v2477 = vpow.pop %v2476
        %v2478 = vmul.f32 %v2464, 1.442695
        %v2479 = vpow.pop %v2478
        %v2480 = vmul.f32 %v2465, 1.442695
        %v2481 = vpow.pop %v2480
        %v2482 = vsel %vm430, %v2467, 0.0
        %2483 = vadd.xlane.f32.xlu0 %v2482
        %v2484 = vpop.xlane.xlu0 %2483
        %v2485 = vsel %vm430, %v2469, 0.0
        %2486 = vadd.xlane.f32.xlu0 %v2485
        %v2487 = vpop.xlane.xlu0 %2486
        %v2488 = vsel %vm430, %v2471, 0.0
        %2489 = vadd.xlane.f32.xlu0 %v2488
        %v2490 = vpop.xlane.xlu0 %2489
        %v2491 = vsel %vm430, %v2473, 0.0
        %2492 = vadd.xlane.f32.xlu0 %v2491
        %v2493 = vpop.xlane.xlu0 %2492
        %v2494 = vsel %vm430, %v2475, 0.0
        %2495 = vadd.xlane.f32.xlu0 %v2494
        %v2496 = vpop.xlane.xlu0 %2495
        %v2497 = vsel %vm430, %v2477, 0.0
        %2498 = vadd.xlane.f32.xlu0 %v2497
        %v2499 = vpop.xlane.xlu0 %2498
        %v2500 = vsel %vm430, %v2479, 0.0
        %2501 = vadd.xlane.f32.xlu0 %v2500
        %v2502 = vpop.xlane.xlu0 %2501
        %v2503 = vsel %vm430, %v2481, 0.0
        %2504 = vadd.xlane.f32.xlu0 %v2503
        %v2505 = vpop.xlane.xlu0 %2504
        %v2506 = vrcp.pop %v2484
        %v2507 = vrcp.pop %v2487
        %v2508 = vrcp.pop %v2490
        %v2509 = vrcp.pop %v2493
        %v2510 = vrcp.pop %v2496
        %v2511 = vrcp.pop %v2499
        %v2512 = vrcp.pop %v2502
        %v2513 = vrcp.pop %v2505
        %v2514 = vmul.f32 %v2467, %v2506
        %v2515 = vmul.f32 %v2469, %v2507
        %v2516 = vmul.f32 %v2471, %v2508
        %v2517 = vmul.f32 %v2473, %v2509
        %v2518 = vmul.f32 %v2475, %v2510
        %v2519 = vmul.f32 %v2477, %v2511
        %v2520 = vmul.f32 %v2479, %v2512
        %v2521 = vmul.f32 %v2481, %v2513
        %v2522 = vpack.c.bf16 %v2515, %v2514
        %v2523 = vpack.c.bf16 %v2517, %v2516
        %v2524 = vpack.c.bf16 %v2519, %v2518
        %v2525 = vpack.c.bf16 %v2521, %v2520
        %v2527 = vsel %vm430, %v2337, 0
        %v2530 = vsel %vm430, %v2522, 0
        %v2533 = vsel %vm430, %v2523, 0
        %v2536 = vsel %vm430, %v2524, 0
        %v2539 = vsel %vm430, %v2525, 0
        %2541 = vmatprep.subr.bf16.mxu0 0
        %2542 = vmatpush1.bf16.xpose.msra.mxu0 0
        %2543 = vmatprep.subr.bf16.mxu0 0
        %2544 = vmatpush1.bf16.xpose.msra.mxu0 0
        %2545 = vmatprep.subr.bf16.mxu0 0
        %2546 = vmatpush1.bf16.xpose.msra.mxu0 0
        %2547 = vmatprep.subr.bf16.mxu0 0
        %2548 = vmatpush1.bf16.xpose.msra.mxu0 0
        %2549 = vmatprep.subr.bf16.mxu0 0
        %2550 = vmatpush1.bf16.xpose.msra.mxu0 %v2539
        %2551 = vmatprep.subr.bf16.mxu0 0
        %2552 = vmatpush1.bf16.xpose.msra.mxu0 %v2536
        %2553 = vmatprep.subr.bf16.mxu0 0
        %2554 = vmatpush1.bf16.xpose.msra.mxu0 %v2533
        %2555 = vmatprep.subr.bf16.mxu0 0
        %2556 = vmatpush1.bf16.xpose.msra.mxu0 %v2530
        %2557 = vmatprep.subr.bf16.mxu0 0
        %2558 = vmatpush2.bf16.xpose.msra.mxu0 0
        %2559 = vmatprep.subr.bf16.mxu0 0
        %2560 = vmatpush2.bf16.xpose.msra.mxu0 0
        %2561 = vmatprep.subr.bf16.mxu0 0
        %2562 = vmatpush2.bf16.xpose.msra.mxu0 0
        %2563 = vmatprep.subr.bf16.mxu0 0
        %2564 = vmatpush2.bf16.xpose.msra.mxu0 0
        %2565 = vmatprep.subr.bf16.mxu0 0
        %2566 = vmatpush2.bf16.xpose.msra.mxu0 0
        %2567 = vmatprep.subr.bf16.mxu0 0
        %2568 = vmatpush2.bf16.xpose.msra.mxu0 0
        %2569 = vmatprep.subr.bf16.mxu0 0
        %2570 = vmatpush2.bf16.xpose.msra.mxu0 0
        %2571 = vmatprep.subr.bf16.mxu0 0
        %2572 = vmatpush2.bf16.xpose.msra.mxu0 0
        %2573 = vmatprep.mubr.bf16.mxu0 0
        %2574 = vmatmul.mubr.bf16.gmra.mxu0 %v2527
        %v2575 = vpop.f32.mrf.mxu0
        %v2576 = vadd.f32 0.0, %v2575
        %v2577 = vpop.f32.mrf.mxu0
        %v2578 = vpop.f32.mrf.mxu0
        %v2579 = vpop.f32.mrf.mxu0
        %2580 = vdwg.mxu0
        %2581 = vst.msk [vmem:[%s163 + $0x38] sm:$0xff] %vm430, %v2576
        %s2582 = sand.u32 %s93, 1
        %s2583 = scalar_lea.sflag [#allocation3], %s2582
        %s2584 = sand.u32 %s93, 1
        %s2585 = smul.addr %s2584, 64
        %s2586 = scalar_lea.vmem [#allocation2], %s2585
        // Predicated region
        $region33: #{tpu_custom_call.1} parent=31 // pred_check
          %p2587 = pneg %p103
        $region34: #{tpu_custom_call.1} parent=31 // pred_check_branch
          %2589 = sbr.rel (%p2587) target = $region36
        $region35: #{tpu_custom_call.1} parent=31 // pred_region
          %s2591 = ssub.s32 1024, 1024
          %2592 = vsyncadd %s2583, %s2591
          %s2593 = smul.addr %s17, 8
          %s2594 = smul.addr %s2593, 128
          %s2595 = scalar_lea.hbm %s3, %s2594
          %s2596 = sshll.u32 %s2586, 4
          %s2597 = int_to_ptr.vmem [resolvable:$true] %s2596
          %2602 = dma.vmem_to_hbm [thread:$0]  %s2597, 1024, %s2595, %s2583, 128, 128, 8
        $region36: #{tpu_custom_call.1} parent=31 // pred_fallthru
          _
      $region32: #{tpu_custom_call.1} parent=5 // pred_fallthru
        _
      %p2603 = scmp.le.s32.totalorder 2, %s12
      // Predicated region
      $region37: #{tpu_custom_call.1} parent=5 // pred_check
        %p2604 = pneg %p2603
      $region38: #{tpu_custom_call.1} parent=5 // pred_check_branch
        %2606 = sbr.rel (%p2604) target = $region40
      $region39: #{tpu_custom_call.1} parent=5 // pred_region
        %s2607 = ssub.s32 %s12, 2
        // Predicated region
        $region41: #{tpu_custom_call.1} parent=39 // pred_check
          %p2608 = pneg %p109
        $region42: #{tpu_custom_call.1} parent=39 // pred_check_branch
          %2610 = sbr.rel (%p2608) target = $region44
        $region43: #{tpu_custom_call.1} parent=39 // pred_region
          %s2611 = sand.u32 %s94, 1
          %s2612 = scalar_lea.sflag [#allocation3], %s2611
          %s2613 = sand.u32 %s94, 1
          %s2614 = smul.addr %s2613, 64
          %s2615 = scalar_lea.vmem [#allocation2], %s2614
          %2616 = dma.done %s2612, 1024
        $region44: #{tpu_custom_call.1} parent=39 // pred_fallthru
          _
      $region40: #{tpu_custom_call.1} parent=5 // pred_fallthru
        _
    $region6: #{tpu_custom_call.1} parent=1 // loop_footer
      %s16 = sadd.s32 1, %s12
    $region7: #{tpu_custom_call.1} parent=1 // loop_footer_branch
      %11 = sbr.rel target = $region3
    $region8: #{tpu_custom_call.1} parent=1 // loop_exit
      _
    %2617 = vsyncpa [#allocation3], 1
    %s2618 = scalar_lea.sflag [#allocation3], 1
    %2619 = vsyncpa %s2618, 1

</llo_original>
